<compile_context>
chip_gen: v7x
topology: tpu7x:2x2x1
jax: 0.10.0
libtpu: 0.0.40
codegen_flags: <defaults>
</compile_context>

<pallas_src>
import jax
import jax.numpy as jnp
from jax import lax
from jax.experimental import pallas as pl
from jax.experimental.pallas import tpu as pltpu

BATCH = 2
SEQ = 16                      # sequence length L
BL = BATCH * SEQ              # batch folded into matmul rows
HIDDEN = 32                   # hidden_size
C_IN = 2                      # BranchNet conv1 has in_channels = 2
K_STEM = 7
K_RES = 3
N_BLOCKS = 3
EPS = 1e-5

# Packed bf16 weight-buffer layout (rows, all with HIDDEN=32 columns):
STEM_ROWS = 16                                 # K_STEM*C_IN=14, padded to 16
RES_ROWS = N_BLOCKS * 2 * K_RES * HIDDEN       # 6 layers x 96 rows = 576
FC_BASE = STEM_ROWS + RES_ROWS                 # 592
POOL_BASE = FC_BASE + HIDDEN                   # 624
POOL_PAD_ROWS = 8                              # P padded to 8 rows (BATCH used)
TOTAL_ROWS = POOL_BASE + POOL_PAD_ROWS         # 632


def branchnet_kernel(xcols_ref, wpack_ref, shifts_ref, out_ref):
    shifts = shifts_ref[...]                              # (8, HIDDEN) f32

    # --- stem: one dot on precomputed im2col columns (contraction = 16) -----
    h = jnp.dot(xcols_ref[...].astype(jnp.bfloat16),
                wpack_ref[0:STEM_ROWS, :],
                preferred_element_type=jnp.float32)       # (BL, H) f32
    h = jnp.maximum(h + shifts[0][None, :], 0.0)

    # Row position within each batch element; masks the conv taps that would
    # otherwise read across a batch boundary (implements same-padding).
    pos = lax.broadcasted_iota(jnp.int32, (BL, 1), 0) % SEQ
    mask_m1 = pos >= 1                                    # tap s = -1 valid
    mask_p1 = pos <= SEQ - 2                              # tap s = +1 valid

    def conv_res(h, layer):
        """Same-padded Conv1d(k=3) + folded (bias, BN) via per-tap MXU dots."""
        base = STEM_ROWS + layer * K_RES * HIDDEN
        # center tap (s = 0, k = 1)
        out = jnp.dot(h.astype(jnp.bfloat16),
                      wpack_ref[base + HIDDEN:base + 2 * HIDDEN, :],
                      preferred_element_type=jnp.float32)
        # left tap (s = -1, k = 0): piece[r] = h[r-1], zeroed at batch start
        p = jnp.where(mask_m1, pltpu.roll(h, shift=1, axis=0), 0.0)
        out += jnp.dot(p.astype(jnp.bfloat16),
                       wpack_ref[base:base + HIDDEN, :],
                       preferred_element_type=jnp.float32)
        # right tap (s = +1, k = 2): piece[r] = h[r+1], zeroed at batch end
        p = jnp.where(mask_p1, pltpu.roll(h, shift=BL - 1, axis=0), 0.0)
        out += jnp.dot(p.astype(jnp.bfloat16),
                       wpack_ref[base + 2 * HIDDEN:base + 3 * HIDDEN, :],
                       preferred_element_type=jnp.float32)
        return out + shifts[1 + layer][None, :]

    # --- 3 residual blocks (in == out channels, so no downsample path) ------
    for blk in range(N_BLOCKS):
        identity = h
        out = jnp.maximum(conv_res(h, 2 * blk), 0.0)
        out = conv_res(out, 2 * blk + 1)
        h = jnp.maximum(out + identity, 0.0)

    # --- global average pool as a tiny matmul, dropout(eval)=id, FC ---------
    # TODO(synk): training-mode dropout (p=0.3) not implemented; eval mode is identity.
    pooled = jnp.dot(wpack_ref[POOL_BASE:POOL_BASE + BATCH, :],
                     h.astype(jnp.bfloat16),
                     preferred_element_type=jnp.float32)  # (B, H) f32
    y = jnp.dot(pooled.astype(jnp.bfloat16),
                wpack_ref[FC_BASE:FC_BASE + HIDDEN, :],
                preferred_element_type=jnp.float32)
    out_ref[...] = (y + shifts[1 + 2 * N_BLOCKS][None, :]).astype(out_ref.dtype)


def stem_im2col(x_nlc):
    """(B, L, C_IN) -> (B*L, 16) im2col columns for the stem conv (k=7, pad=3).

    Column order is tap-major, channel-minor, matching the packed stem weight;
    the last 2 columns are zero padding to reach a clean bf16 contraction of 16.
    """
    B, L, C = x_nlc.shape
    pad = K_STEM // 2
    xp = jnp.pad(x_nlc, ((0, 0), (pad, pad), (0, 0)))
    cols = jnp.concatenate([xp[:, k:k + L, :] for k in range(K_STEM)], axis=-1)
    cols = cols.reshape(B * L, K_STEM * C)
    return jnp.pad(cols, ((0, 0), (0, STEM_ROWS - K_STEM * C))).astype(jnp.float32)


def branchnet_forward(x_nlc, params):
    """x_nlc: (B, L, C_IN) float32. Returns (B, HIDDEN) float32."""
    wpack, shifts = params
    x_cols = stem_im2col(x_nlc)
    # Single grid step; whole model (~45 KiB) + activations stay in VMEM.
    return pl.pallas_call(
        branchnet_kernel,
        out_shape=jax.ShapeDtypeStruct((BATCH, HIDDEN), jnp.float32),
    )(x_cols, wpack, shifts)


def init_params(key):
    """Deterministic synthetic parameters matching BranchNet's shapes.

    Conv bias + eval-mode BatchNorm are folded into the conv taps host-side:
      scale = gamma/sqrt(var+eps); W' = W*scale; shift = beta - mean*scale + bias*scale.
    PyTorch Conv1d weight (Cout, Cin, K) is stored tap-major as (K*Cin, Cout).
    Linear weight (out, in) is stored transposed as (in, out).
    Everything bf16-castable is packed into one (TOTAL_ROWS, HIDDEN) buffer.
    """
    ks = jax.random.split(key, 14)
    nrm = lambda k, shape, s: s * jax.random.normal(k, shape, jnp.float32)

    # Stem conv + BN1.
    w1 = nrm(ks[0], (K_STEM, C_IN, HIDDEN), 0.10)
    b1 = nrm(ks[1], (HIDDEN,), 0.10)
    g1 = 1.0 + nrm(ks[2], (HIDDEN,), 0.10)
    be1 = nrm(ks[3], (HIDDEN,), 0.10)
    m1 = nrm(ks[4], (HIDDEN,), 0.05)
    v1 = 1.0 + 0.1 * jnp.abs(jax.random.normal(ks[5], (HIDDEN,), jnp.float32))
    sc1 = g1 / jnp.sqrt(v1 + EPS)
    stem_w = (w1 * sc1[None, None, :]).reshape(K_STEM * C_IN, HIDDEN)
    stem_w = jnp.pad(stem_w, ((0, STEM_ROWS - K_STEM * C_IN), (0, 0)))
    stem_shift = be1 - m1 * sc1 + b1 * sc1

    # 3 residual blocks = 6 (conv + BN) layers.
    rw = nrm(ks[6], (N_BLOCKS * 2, K_RES, HIDDEN, HIDDEN), 0.05)
    rb = nrm(ks[7], (N_BLOCKS * 2, HIDDEN), 0.05)
    gr = 1.0 + nrm(ks[8], (N_BLOCKS * 2, HIDDEN), 0.10)
    br = nrm(ks[9], (N_BLOCKS * 2, HIDDEN), 0.10)
    mr = nrm(ks[10], (N_BLOCKS * 2, HIDDEN), 0.05)
    vr = 1.0 + 0.1 * jnp.abs(jax.random.normal(ks[11], (N_BLOCKS * 2, HIDDEN),
                                               jnp.float32))
    scr = gr / jnp.sqrt(vr + EPS)
    res_w = (rw * scr[:, None, None, :]).reshape(RES_ROWS, HIDDEN)
    res_shift = br - mr * scr + rb * scr

    # FC layer (weight stored (in, out)).
    fcw = nrm(ks[12], (HIDDEN, HIDDEN), 0.10)
    fcb = nrm(ks[13], (HIDDEN,), 0.10)

    # Averaging matrix P: row b has 1/SEQ over that batch element's rows.
    # Packed-buffer columns are shared between weights (HIDDEN) and P (BL).
    assert BL == HIDDEN, "packed buffer assumes BATCH*SEQ == HIDDEN"
    row = jnp.arange(POOL_PAD_ROWS)[:, None]
    col = jnp.arange(BL)[None, :]
    pool = jnp.where((row < BATCH) & (col // SEQ == row),
                     1.0 / SEQ, 0.0).astype(jnp.float32)

    wpack = jnp.concatenate([stem_w, res_w, fcw, pool],
                            axis=0).astype(jnp.bfloat16)          # (632, 32)
    # Row 0 = stem shift, rows 1..6 = res conv shifts, row 7 = fc bias.
    shifts = jnp.concatenate([stem_shift[None, :], res_shift, fcb[None, :]],
                             axis=0)                               # (8, 32) f32
    return wpack, shifts


if __name__ == "__main__":
    key = jax.random.PRNGKey(0)
    kx, kp = jax.random.split(key)

    # PyTorch input layout is NCL: (batch=2, channels=2, seq=16).
    x_ncl = jax.random.normal(kx, (BATCH, C_IN, SEQ), jnp.float32)
    x_nlc = jnp.transpose(x_ncl, (0, 2, 1))                  # kernel layout NLC

    params = init_params(kp)
    y = jax.jit(branchnet_forward)(x_nlc, params)
    y = jax.block_until_ready(y)
    assert y.shape == (BATCH, HIDDEN) and y.dtype == jnp.float32
    print("KERNEL_OK")
</pallas_src>

<mosaic_0001>
module attributes {stable_mosaic.version = 11 : i64} {
  func.func @branchnet_kernel(%arg0: memref<32x16xf32, #tpu.memory_space<vmem>>, %arg1: memref<632x32xbf16, #tpu.memory_space<vmem>>, %arg2: memref<8x32xf32, #tpu.memory_space<vmem>>, %arg3: memref<2x32xf32, #tpu.memory_space<vmem>>) attributes {dimension_semantics = [], scalar_prefetch = 0 : i64, scratch_operands = 0 : i64, tpu.core_type = #tpu.core_type<tc>} {
    %c0 = arith.constant 0 : index
    %c0_0 = arith.constant 0 : index
    %0 = vector.load %arg2[%c0, %c0_0] : memref<8x32xf32, #tpu.memory_space<vmem>>, vector<8x32xf32>
    %c0_1 = arith.constant 0 : index
    %c0_2 = arith.constant 0 : index
    %1 = vector.load %arg0[%c0_1, %c0_2] : memref<32x16xf32, #tpu.memory_space<vmem>>, vector<32x16xf32>
    %2 = arith.truncf %1 : vector<32x16xf32> to vector<32x16xbf16>
    %c0_3 = arith.constant 0 : index
    %c0_4 = arith.constant 0 : index
    %3 = vector.load %arg1[%c0_3, %c0_4] : memref<632x32xbf16, #tpu.memory_space<vmem>>, vector<16x32xbf16>
    %cst = arith.constant dense<0.000000e+00> : vector<32x32xf32>
    %4 = tpu.matmul %2, %3, %cst {dimension_numbers = #tpu.dot_dimension_numbers<[1], [0], [0], [1], [0, 0, 1, 1], [], []>} : vector<32x16xbf16>, vector<16x32xbf16>, vector<32x32xf32> -> vector<32x32xf32>
    %5 = vector.extract_strided_slice %0 {offsets = [0, 0], sizes = [1, 32], strides = [1, 1]} : vector<8x32xf32> to vector<1x32xf32>
    %6 = vector.shape_cast %5 : vector<1x32xf32> to vector<32xf32>
    %7 = vector.shape_cast %6 : vector<32xf32> to vector<1x32xf32>
    %8 = vector.broadcast %7 : vector<1x32xf32> to vector<32x32xf32>
    %9 = arith.addf %4, %8 : vector<32x32xf32>
    %cst_5 = arith.constant 0.000000e+00 : f32
    %10 = vector.broadcast %cst_5 : f32 to vector<32x32xf32>
    %11 = arith.maximumf %9, %10 : vector<32x32xf32>
    %12 = tpu.iota {dimensions = array<i32: 0>} : vector<32x1xi32>
    %c16_i32 = arith.constant 16 : i32
    %c0_i32 = arith.constant 0 : i32
    %13 = arith.cmpi eq, %c16_i32, %c0_i32 : i32
    %c1_i32 = arith.constant 1 : i32
    %14 = arith.select %13, %c1_i32, %c16_i32 : i32
    %15 = vector.broadcast %14 : i32 to vector<32x1xi32>
    %16 = arith.remsi %12, %15 : vector<32x1xi32>
    %c0_i32_6 = arith.constant 0 : i32
    %17 = vector.broadcast %c0_i32_6 : i32 to vector<32x1xi32>
    %18 = arith.cmpi ne, %16, %17 : vector<32x1xi32>
    %c0_i32_7 = arith.constant 0 : i32
    %19 = vector.broadcast %c0_i32_7 : i32 to vector<32x1xi32>
    %20 = arith.cmpi slt, %16, %19 : vector<32x1xi32>
    %c0_i32_8 = arith.constant 0 : i32
    %21 = arith.cmpi slt, %14, %c0_i32_8 : i32
    %22 = vector.broadcast %21 : i1 to vector<32x1xi1>
    %23 = vector.broadcast %22 : vector<32x1xi1> to vector<32x1xi1>
    %24 = arith.xori %20, %23 : vector<32x1xi1>
    %25 = arith.andi %24, %18 : vector<32x1xi1>
    %26 = vector.broadcast %14 : i32 to vector<32x1xi32>
    %27 = arith.addi %16, %26 : vector<32x1xi32>
    %28 = arith.select %25, %27, %16 : vector<32x1xi1>, vector<32x1xi32>
    %c1_i32_9 = arith.constant 1 : i32
    %29 = vector.broadcast %c1_i32_9 : i32 to vector<32x1xi32>
    %30 = arith.cmpi sge, %28, %29 : vector<32x1xi32>
    %c14_i32 = arith.constant 14 : i32
    %31 = vector.broadcast %c14_i32 : i32 to vector<32x1xi32>
    %32 = arith.cmpi sle, %28, %31 : vector<32x1xi32>
    %33 = arith.truncf %11 : vector<32x32xf32> to vector<32x32xbf16>
    %c48 = arith.constant 48 : index
    %c0_10 = arith.constant 0 : index
    %34 = vector.load %arg1[%c48, %c0_10] : memref<632x32xbf16, #tpu.memory_space<vmem>>, vector<32x32xbf16>
    %cst_11 = arith.constant dense<0.000000e+00> : vector<32x32xf32>
    %35 = tpu.matmul %33, %34, %cst_11 {dimension_numbers = #tpu.dot_dimension_numbers<[1], [0], [0], [1], [0, 0, 1, 1], [], []>} : vector<32x32xbf16>, vector<32x32xbf16>, vector<32x32xf32> -> vector<32x32xf32>
    %c1_i32_12 = arith.constant 1 : i32
    %36 = tpu.dynamic_rotate %11 by %c1_i32_12 dim 0 : vector<32x32xf32>, i32 -> vector<32x32xf32>
    %cst_13 = arith.constant 0.000000e+00 : f32
    %37 = vector.shape_cast %30 : vector<32x1xi1> to vector<32x1xi1>
    %38 = vector.broadcast %37 : vector<32x1xi1> to vector<32x32xi1>
    %39 = vector.broadcast %cst_13 : f32 to vector<32x32xf32>
    %40 = arith.select %38, %36, %39 : vector<32x32xi1>, vector<32x32xf32>
    %41 = arith.truncf %40 : vector<32x32xf32> to vector<32x32xbf16>
    %c16 = arith.constant 16 : index
    %c0_14 = arith.constant 0 : index
    %42 = vector.load %arg1[%c16, %c0_14] : memref<632x32xbf16, #tpu.memory_space<vmem>>, vector<32x32xbf16>
    %cst_15 = arith.constant dense<0.000000e+00> : vector<32x32xf32>
    %43 = tpu.matmul %41, %42, %cst_15 {dimension_numbers = #tpu.dot_dimension_numbers<[1], [0], [0], [1], [0, 0, 1, 1], [], []>} : vector<32x32xbf16>, vector<32x32xbf16>, vector<32x32xf32> -> vector<32x32xf32>
    %44 = arith.addf %35, %43 : vector<32x32xf32>
    %c31_i32 = arith.constant 31 : i32
    %45 = tpu.dynamic_rotate %11 by %c31_i32 dim 0 : vector<32x32xf32>, i32 -> vector<32x32xf32>
    %cst_16 = arith.constant 0.000000e+00 : f32
    %46 = vector.shape_cast %32 : vector<32x1xi1> to vector<32x1xi1>
    %47 = vector.broadcast %46 : vector<32x1xi1> to vector<32x32xi1>
    %48 = vector.broadcast %cst_16 : f32 to vector<32x32xf32>
    %49 = arith.select %47, %45, %48 : vector<32x32xi1>, vector<32x32xf32>
    %50 = arith.truncf %49 : vector<32x32xf32> to vector<32x32xbf16>
    %c80 = arith.constant 80 : index
    %c0_17 = arith.constant 0 : index
    %51 = vector.load %arg1[%c80, %c0_17] : memref<632x32xbf16, #tpu.memory_space<vmem>>, vector<32x32xbf16>
    %cst_18 = arith.constant dense<0.000000e+00> : vector<32x32xf32>
    %52 = tpu.matmul %50, %51, %cst_18 {dimension_numbers = #tpu.dot_dimension_numbers<[1], [0], [0], [1], [0, 0, 1, 1], [], []>} : vector<32x32xbf16>, vector<32x32xbf16>, vector<32x32xf32> -> vector<32x32xf32>
    %53 = arith.addf %44, %52 : vector<32x32xf32>
    %54 = vector.extract_strided_slice %0 {offsets = [1, 0], sizes = [1, 32], strides = [1, 1]} : vector<8x32xf32> to vector<1x32xf32>
    %55 = vector.shape_cast %54 : vector<1x32xf32> to vector<32xf32>
    %56 = vector.shape_cast %55 : vector<32xf32> to vector<1x32xf32>
    %57 = vector.broadcast %56 : vector<1x32xf32> to vector<32x32xf32>
    %58 = arith.addf %53, %57 : vector<32x32xf32>
    %cst_19 = arith.constant 0.000000e+00 : f32
    %59 = vector.broadcast %cst_19 : f32 to vector<32x32xf32>
    %60 = arith.maximumf %58, %59 : vector<32x32xf32>
    %61 = arith.truncf %60 : vector<32x32xf32> to vector<32x32xbf16>
    %c144 = arith.constant 144 : index
    %c0_20 = arith.constant 0 : index
    %62 = vector.load %arg1[%c144, %c0_20] : memref<632x32xbf16, #tpu.memory_space<vmem>>, vector<32x32xbf16>
    %cst_21 = arith.constant dense<0.000000e+00> : vector<32x32xf32>
    %63 = tpu.matmul %61, %62, %cst_21 {dimension_numbers = #tpu.dot_dimension_numbers<[1], [0], [0], [1], [0, 0, 1, 1], [], []>} : vector<32x32xbf16>, vector<32x32xbf16>, vector<32x32xf32> -> vector<32x32xf32>
    %c1_i32_22 = arith.constant 1 : i32
    %64 = tpu.dynamic_rotate %60 by %c1_i32_22 dim 0 : vector<32x32xf32>, i32 -> vector<32x32xf32>
    %cst_23 = arith.constant 0.000000e+00 : f32
    %65 = vector.shape_cast %30 : vector<32x1xi1> to vector<32x1xi1>
    %66 = vector.broadcast %65 : vector<32x1xi1> to vector<32x32xi1>
    %67 = vector.broadcast %cst_23 : f32 to vector<32x32xf32>
    %68 = arith.select %66, %64, %67 : vector<32x32xi1>, vector<32x32xf32>
    %69 = arith.truncf %68 : vector<32x32xf32> to vector<32x32xbf16>
    %c112 = arith.constant 112 : index
    %c0_24 = arith.constant 0 : index
    %70 = vector.load %arg1[%c112, %c0_24] : memref<632x32xbf16, #tpu.memory_space<vmem>>, vector<32x32xbf16>
    %cst_25 = arith.constant dense<0.000000e+00> : vector<32x32xf32>
    %71 = tpu.matmul %69, %70, %cst_25 {dimension_numbers = #tpu.dot_dimension_numbers<[1], [0], [0], [1], [0, 0, 1, 1], [], []>} : vector<32x32xbf16>, vector<32x32xbf16>, vector<32x32xf32> -> vector<32x32xf32>
    %72 = arith.addf %63, %71 : vector<32x32xf32>
    %c31_i32_26 = arith.constant 31 : i32
    %73 = tpu.dynamic_rotate %60 by %c31_i32_26 dim 0 : vector<32x32xf32>, i32 -> vector<32x32xf32>
    %cst_27 = arith.constant 0.000000e+00 : f32
    %74 = vector.shape_cast %32 : vector<32x1xi1> to vector<32x1xi1>
    %75 = vector.broadcast %74 : vector<32x1xi1> to vector<32x32xi1>
    %76 = vector.broadcast %cst_27 : f32 to vector<32x32xf32>
    %77 = arith.select %75, %73, %76 : vector<32x32xi1>, vector<32x32xf32>
    %78 = arith.truncf %77 : vector<32x32xf32> to vector<32x32xbf16>
    %c176 = arith.constant 176 : index
    %c0_28 = arith.constant 0 : index
    %79 = vector.load %arg1[%c176, %c0_28] : memref<632x32xbf16, #tpu.memory_space<vmem>>, vector<32x32xbf16>
    %cst_29 = arith.constant dense<0.000000e+00> : vector<32x32xf32>
    %80 = tpu.matmul %78, %79, %cst_29 {dimension_numbers = #tpu.dot_dimension_numbers<[1], [0], [0], [1], [0, 0, 1, 1], [], []>} : vector<32x32xbf16>, vector<32x32xbf16>, vector<32x32xf32> -> vector<32x32xf32>
    %81 = arith.addf %72, %80 : vector<32x32xf32>
    %82 = vector.extract_strided_slice %0 {offsets = [2, 0], sizes = [1, 32], strides = [1, 1]} : vector<8x32xf32> to vector<1x32xf32>
    %83 = vector.shape_cast %82 : vector<1x32xf32> to vector<32xf32>
    %84 = vector.shape_cast %83 : vector<32xf32> to vector<1x32xf32>
    %85 = vector.broadcast %84 : vector<1x32xf32> to vector<32x32xf32>
    %86 = arith.addf %81, %85 : vector<32x32xf32>
    %87 = arith.addf %86, %11 : vector<32x32xf32>
    %cst_30 = arith.constant 0.000000e+00 : f32
    %88 = vector.broadcast %cst_30 : f32 to vector<32x32xf32>
    %89 = arith.maximumf %87, %88 : vector<32x32xf32>
    %90 = arith.truncf %89 : vector<32x32xf32> to vector<32x32xbf16>
    %c240 = arith.constant 240 : index
    %c0_31 = arith.constant 0 : index
    %91 = vector.load %arg1[%c240, %c0_31] : memref<632x32xbf16, #tpu.memory_space<vmem>>, vector<32x32xbf16>
    %cst_32 = arith.constant dense<0.000000e+00> : vector<32x32xf32>
    %92 = tpu.matmul %90, %91, %cst_32 {dimension_numbers = #tpu.dot_dimension_numbers<[1], [0], [0], [1], [0, 0, 1, 1], [], []>} : vector<32x32xbf16>, vector<32x32xbf16>, vector<32x32xf32> -> vector<32x32xf32>
    %c1_i32_33 = arith.constant 1 : i32
    %93 = tpu.dynamic_rotate %89 by %c1_i32_33 dim 0 : vector<32x32xf32>, i32 -> vector<32x32xf32>
    %cst_34 = arith.constant 0.000000e+00 : f32
    %94 = vector.shape_cast %30 : vector<32x1xi1> to vector<32x1xi1>
    %95 = vector.broadcast %94 : vector<32x1xi1> to vector<32x32xi1>
    %96 = vector.broadcast %cst_34 : f32 to vector<32x32xf32>
    %97 = arith.select %95, %93, %96 : vector<32x32xi1>, vector<32x32xf32>
    %98 = arith.truncf %97 : vector<32x32xf32> to vector<32x32xbf16>
    %c208 = arith.constant 208 : index
    %c0_35 = arith.constant 0 : index
    %99 = vector.load %arg1[%c208, %c0_35] : memref<632x32xbf16, #tpu.memory_space<vmem>>, vector<32x32xbf16>
    %cst_36 = arith.constant dense<0.000000e+00> : vector<32x32xf32>
    %100 = tpu.matmul %98, %99, %cst_36 {dimension_numbers = #tpu.dot_dimension_numbers<[1], [0], [0], [1], [0, 0, 1, 1], [], []>} : vector<32x32xbf16>, vector<32x32xbf16>, vector<32x32xf32> -> vector<32x32xf32>
    %101 = arith.addf %92, %100 : vector<32x32xf32>
    %c31_i32_37 = arith.constant 31 : i32
    %102 = tpu.dynamic_rotate %89 by %c31_i32_37 dim 0 : vector<32x32xf32>, i32 -> vector<32x32xf32>
    %cst_38 = arith.constant 0.000000e+00 : f32
    %103 = vector.shape_cast %32 : vector<32x1xi1> to vector<32x1xi1>
    %104 = vector.broadcast %103 : vector<32x1xi1> to vector<32x32xi1>
    %105 = vector.broadcast %cst_38 : f32 to vector<32x32xf32>
    %106 = arith.select %104, %102, %105 : vector<32x32xi1>, vector<32x32xf32>
    %107 = arith.truncf %106 : vector<32x32xf32> to vector<32x32xbf16>
    %c272 = arith.constant 272 : index
    %c0_39 = arith.constant 0 : index
    %108 = vector.load %arg1[%c272, %c0_39] : memref<632x32xbf16, #tpu.memory_space<vmem>>, vector<32x32xbf16>
    %cst_40 = arith.constant dense<0.000000e+00> : vector<32x32xf32>
    %109 = tpu.matmul %107, %108, %cst_40 {dimension_numbers = #tpu.dot_dimension_numbers<[1], [0], [0], [1], [0, 0, 1, 1], [], []>} : vector<32x32xbf16>, vector<32x32xbf16>, vector<32x32xf32> -> vector<32x32xf32>
    %110 = arith.addf %101, %109 : vector<32x32xf32>
    %111 = vector.extract_strided_slice %0 {offsets = [3, 0], sizes = [1, 32], strides = [1, 1]} : vector<8x32xf32> to vector<1x32xf32>
    %112 = vector.shape_cast %111 : vector<1x32xf32> to vector<32xf32>
    %113 = vector.shape_cast %112 : vector<32xf32> to vector<1x32xf32>
    %114 = vector.broadcast %113 : vector<1x32xf32> to vector<32x32xf32>
    %115 = arith.addf %110, %114 : vector<32x32xf32>
    %cst_41 = arith.constant 0.000000e+00 : f32
    %116 = vector.broadcast %cst_41 : f32 to vector<32x32xf32>
    %117 = arith.maximumf %115, %116 : vector<32x32xf32>
    %118 = arith.truncf %117 : vector<32x32xf32> to vector<32x32xbf16>
    %c336 = arith.constant 336 : index
    %c0_42 = arith.constant 0 : index
    %119 = vector.load %arg1[%c336, %c0_42] : memref<632x32xbf16, #tpu.memory_space<vmem>>, vector<32x32xbf16>
    %cst_43 = arith.constant dense<0.000000e+00> : vector<32x32xf32>
    %120 = tpu.matmul %118, %119, %cst_43 {dimension_numbers = #tpu.dot_dimension_numbers<[1], [0], [0], [1], [0, 0, 1, 1], [], []>} : vector<32x32xbf16>, vector<32x32xbf16>, vector<32x32xf32> -> vector<32x32xf32>
    %c1_i32_44 = arith.constant 1 : i32
    %121 = tpu.dynamic_rotate %117 by %c1_i32_44 dim 0 : vector<32x32xf32>, i32 -> vector<32x32xf32>
    %cst_45 = arith.constant 0.000000e+00 : f32
    %122 = vector.shape_cast %30 : vector<32x1xi1> to vector<32x1xi1>
    %123 = vector.broadcast %122 : vector<32x1xi1> to vector<32x32xi1>
    %124 = vector.broadcast %cst_45 : f32 to vector<32x32xf32>
    %125 = arith.select %123, %121, %124 : vector<32x32xi1>, vector<32x32xf32>
    %126 = arith.truncf %125 : vector<32x32xf32> to vector<32x32xbf16>
    %c304 = arith.constant 304 : index
    %c0_46 = arith.constant 0 : index
    %127 = vector.load %arg1[%c304, %c0_46] : memref<632x32xbf16, #tpu.memory_space<vmem>>, vector<32x32xbf16>
    %cst_47 = arith.constant dense<0.000000e+00> : vector<32x32xf32>
    %128 = tpu.matmul %126, %127, %cst_47 {dimension_numbers = #tpu.dot_dimension_numbers<[1], [0], [0], [1], [0, 0, 1, 1], [], []>} : vector<32x32xbf16>, vector<32x32xbf16>, vector<32x32xf32> -> vector<32x32xf32>
    %129 = arith.addf %120, %128 : vector<32x32xf32>
    %c31_i32_48 = arith.constant 31 : i32
    %130 = tpu.dynamic_rotate %117 by %c31_i32_48 dim 0 : vector<32x32xf32>, i32 -> vector<32x32xf32>
    %cst_49 = arith.constant 0.000000e+00 : f32
    %131 = vector.shape_cast %32 : vector<32x1xi1> to vector<32x1xi1>
    %132 = vector.broadcast %131 : vector<32x1xi1> to vector<32x32xi1>
    %133 = vector.broadcast %cst_49 : f32 to vector<32x32xf32>
    %134 = arith.select %132, %130, %133 : vector<32x32xi1>, vector<32x32xf32>
    %135 = arith.truncf %134 : vector<32x32xf32> to vector<32x32xbf16>
    %c368 = arith.constant 368 : index
    %c0_50 = arith.constant 0 : index
    %136 = vector.load %arg1[%c368, %c0_50] : memref<632x32xbf16, #tpu.memory_space<vmem>>, vector<32x32xbf16>
    %cst_51 = arith.constant dense<0.000000e+00> : vector<32x32xf32>
    %137 = tpu.matmul %135, %136, %cst_51 {dimension_numbers = #tpu.dot_dimension_numbers<[1], [0], [0], [1], [0, 0, 1, 1], [], []>} : vector<32x32xbf16>, vector<32x32xbf16>, vector<32x32xf32> -> vector<32x32xf32>
    %138 = arith.addf %129, %137 : vector<32x32xf32>
    %139 = vector.extract_strided_slice %0 {offsets = [4, 0], sizes = [1, 32], strides = [1, 1]} : vector<8x32xf32> to vector<1x32xf32>
    %140 = vector.shape_cast %139 : vector<1x32xf32> to vector<32xf32>
    %141 = vector.shape_cast %140 : vector<32xf32> to vector<1x32xf32>
    %142 = vector.broadcast %141 : vector<1x32xf32> to vector<32x32xf32>
    %143 = arith.addf %138, %142 : vector<32x32xf32>
    %144 = arith.addf %143, %89 : vector<32x32xf32>
    %cst_52 = arith.constant 0.000000e+00 : f32
    %145 = vector.broadcast %cst_52 : f32 to vector<32x32xf32>
    %146 = arith.maximumf %144, %145 : vector<32x32xf32>
    %147 = arith.truncf %146 : vector<32x32xf32> to vector<32x32xbf16>
    %c432 = arith.constant 432 : index
    %c0_53 = arith.constant 0 : index
    %148 = vector.load %arg1[%c432, %c0_53] : memref<632x32xbf16, #tpu.memory_space<vmem>>, vector<32x32xbf16>
    %cst_54 = arith.constant dense<0.000000e+00> : vector<32x32xf32>
    %149 = tpu.matmul %147, %148, %cst_54 {dimension_numbers = #tpu.dot_dimension_numbers<[1], [0], [0], [1], [0, 0, 1, 1], [], []>} : vector<32x32xbf16>, vector<32x32xbf16>, vector<32x32xf32> -> vector<32x32xf32>
    %c1_i32_55 = arith.constant 1 : i32
    %150 = tpu.dynamic_rotate %146 by %c1_i32_55 dim 0 : vector<32x32xf32>, i32 -> vector<32x32xf32>
    %cst_56 = arith.constant 0.000000e+00 : f32
    %151 = vector.shape_cast %30 : vector<32x1xi1> to vector<32x1xi1>
    %152 = vector.broadcast %151 : vector<32x1xi1> to vector<32x32xi1>
    %153 = vector.broadcast %cst_56 : f32 to vector<32x32xf32>
    %154 = arith.select %152, %150, %153 : vector<32x32xi1>, vector<32x32xf32>
    %155 = arith.truncf %154 : vector<32x32xf32> to vector<32x32xbf16>
    %c400 = arith.constant 400 : index
    %c0_57 = arith.constant 0 : index
    %156 = vector.load %arg1[%c400, %c0_57] : memref<632x32xbf16, #tpu.memory_space<vmem>>, vector<32x32xbf16>
    %cst_58 = arith.constant dense<0.000000e+00> : vector<32x32xf32>
    %157 = tpu.matmul %155, %156, %cst_58 {dimension_numbers = #tpu.dot_dimension_numbers<[1], [0], [0], [1], [0, 0, 1, 1], [], []>} : vector<32x32xbf16>, vector<32x32xbf16>, vector<32x32xf32> -> vector<32x32xf32>
    %158 = arith.addf %149, %157 : vector<32x32xf32>
    %c31_i32_59 = arith.constant 31 : i32
    %159 = tpu.dynamic_rotate %146 by %c31_i32_59 dim 0 : vector<32x32xf32>, i32 -> vector<32x32xf32>
    %cst_60 = arith.constant 0.000000e+00 : f32
    %160 = vector.shape_cast %32 : vector<32x1xi1> to vector<32x1xi1>
    %161 = vector.broadcast %160 : vector<32x1xi1> to vector<32x32xi1>
    %162 = vector.broadcast %cst_60 : f32 to vector<32x32xf32>
    %163 = arith.select %161, %159, %162 : vector<32x32xi1>, vector<32x32xf32>
    %164 = arith.truncf %163 : vector<32x32xf32> to vector<32x32xbf16>
    %c464 = arith.constant 464 : index
    %c0_61 = arith.constant 0 : index
    %165 = vector.load %arg1[%c464, %c0_61] : memref<632x32xbf16, #tpu.memory_space<vmem>>, vector<32x32xbf16>
    %cst_62 = arith.constant dense<0.000000e+00> : vector<32x32xf32>
    %166 = tpu.matmul %164, %165, %cst_62 {dimension_numbers = #tpu.dot_dimension_numbers<[1], [0], [0], [1], [0, 0, 1, 1], [], []>} : vector<32x32xbf16>, vector<32x32xbf16>, vector<32x32xf32> -> vector<32x32xf32>
    %167 = arith.addf %158, %166 : vector<32x32xf32>
    %168 = vector.extract_strided_slice %0 {offsets = [5, 0], sizes = [1, 32], strides = [1, 1]} : vector<8x32xf32> to vector<1x32xf32>
    %169 = vector.shape_cast %168 : vector<1x32xf32> to vector<32xf32>
    %170 = vector.shape_cast %169 : vector<32xf32> to vector<1x32xf32>
    %171 = vector.broadcast %170 : vector<1x32xf32> to vector<32x32xf32>
    %172 = arith.addf %167, %171 : vector<32x32xf32>
    %cst_63 = arith.constant 0.000000e+00 : f32
    %173 = vector.broadcast %cst_63 : f32 to vector<32x32xf32>
    %174 = arith.maximumf %172, %173 : vector<32x32xf32>
    %175 = arith.truncf %174 : vector<32x32xf32> to vector<32x32xbf16>
    %c528 = arith.constant 528 : index
    %c0_64 = arith.constant 0 : index
    %176 = vector.load %arg1[%c528, %c0_64] : memref<632x32xbf16, #tpu.memory_space<vmem>>, vector<32x32xbf16>
    %cst_65 = arith.constant dense<0.000000e+00> : vector<32x32xf32>
    %177 = tpu.matmul %175, %176, %cst_65 {dimension_numbers = #tpu.dot_dimension_numbers<[1], [0], [0], [1], [0, 0, 1, 1], [], []>} : vector<32x32xbf16>, vector<32x32xbf16>, vector<32x32xf32> -> vector<32x32xf32>
    %c1_i32_66 = arith.constant 1 : i32
    %178 = tpu.dynamic_rotate %174 by %c1_i32_66 dim 0 : vector<32x32xf32>, i32 -> vector<32x32xf32>
    %cst_67 = arith.constant 0.000000e+00 : f32
    %179 = vector.shape_cast %30 : vector<32x1xi1> to vector<32x1xi1>
    %180 = vector.broadcast %179 : vector<32x1xi1> to vector<32x32xi1>
    %181 = vector.broadcast %cst_67 : f32 to vector<32x32xf32>
    %182 = arith.select %180, %178, %181 : vector<32x32xi1>, vector<32x32xf32>
    %183 = arith.truncf %182 : vector<32x32xf32> to vector<32x32xbf16>
    %c496 = arith.constant 496 : index
    %c0_68 = arith.constant 0 : index
    %184 = vector.load %arg1[%c496, %c0_68] : memref<632x32xbf16, #tpu.memory_space<vmem>>, vector<32x32xbf16>
    %cst_69 = arith.constant dense<0.000000e+00> : vector<32x32xf32>
    %185 = tpu.matmul %183, %184, %cst_69 {dimension_numbers = #tpu.dot_dimension_numbers<[1], [0], [0], [1], [0, 0, 1, 1], [], []>} : vector<32x32xbf16>, vector<32x32xbf16>, vector<32x32xf32> -> vector<32x32xf32>
    %186 = arith.addf %177, %185 : vector<32x32xf32>
    %c31_i32_70 = arith.constant 31 : i32
    %187 = tpu.dynamic_rotate %174 by %c31_i32_70 dim 0 : vector<32x32xf32>, i32 -> vector<32x32xf32>
    %cst_71 = arith.constant 0.000000e+00 : f32
    %188 = vector.shape_cast %32 : vector<32x1xi1> to vector<32x1xi1>
    %189 = vector.broadcast %188 : vector<32x1xi1> to vector<32x32xi1>
    %190 = vector.broadcast %cst_71 : f32 to vector<32x32xf32>
    %191 = arith.select %189, %187, %190 : vector<32x32xi1>, vector<32x32xf32>
    %192 = arith.truncf %191 : vector<32x32xf32> to vector<32x32xbf16>
    %c560 = arith.constant 560 : index
    %c0_72 = arith.constant 0 : index
    %193 = vector.load %arg1[%c560, %c0_72] : memref<632x32xbf16, #tpu.memory_space<vmem>>, vector<32x32xbf16>
    %cst_73 = arith.constant dense<0.000000e+00> : vector<32x32xf32>
    %194 = tpu.matmul %192, %193, %cst_73 {dimension_numbers = #tpu.dot_dimension_numbers<[1], [0], [0], [1], [0, 0, 1, 1], [], []>} : vector<32x32xbf16>, vector<32x32xbf16>, vector<32x32xf32> -> vector<32x32xf32>
    %195 = arith.addf %186, %194 : vector<32x32xf32>
    %196 = vector.extract_strided_slice %0 {offsets = [6, 0], sizes = [1, 32], strides = [1, 1]} : vector<8x32xf32> to vector<1x32xf32>
    %197 = vector.shape_cast %196 : vector<1x32xf32> to vector<32xf32>
    %198 = vector.shape_cast %197 : vector<32xf32> to vector<1x32xf32>
    %199 = vector.broadcast %198 : vector<1x32xf32> to vector<32x32xf32>
    %200 = arith.addf %195, %199 : vector<32x32xf32>
    %201 = arith.addf %200, %146 : vector<32x32xf32>
    %cst_74 = arith.constant 0.000000e+00 : f32
    %202 = vector.broadcast %cst_74 : f32 to vector<32x32xf32>
    %203 = arith.maximumf %201, %202 : vector<32x32xf32>
    %c624 = arith.constant 624 : index
    %c0_75 = arith.constant 0 : index
    %204 = vector.load %arg1[%c624, %c0_75] : memref<632x32xbf16, #tpu.memory_space<vmem>>, vector<2x32xbf16>
    %205 = arith.truncf %203 : vector<32x32xf32> to vector<32x32xbf16>
    %cst_76 = arith.constant dense<0.000000e+00> : vector<2x32xf32>
    %206 = tpu.matmul %204, %205, %cst_76 {dimension_numbers = #tpu.dot_dimension_numbers<[1], [0], [0], [1], [0, 0, 1, 1], [], []>} : vector<2x32xbf16>, vector<32x32xbf16>, vector<2x32xf32> -> vector<2x32xf32>
    %207 = arith.truncf %206 : vector<2x32xf32> to vector<2x32xbf16>
    %c592 = arith.constant 592 : index
    %c0_77 = arith.constant 0 : index
    %208 = vector.load %arg1[%c592, %c0_77] : memref<632x32xbf16, #tpu.memory_space<vmem>>, vector<32x32xbf16>
    %cst_78 = arith.constant dense<0.000000e+00> : vector<2x32xf32>
    %209 = tpu.matmul %207, %208, %cst_78 {dimension_numbers = #tpu.dot_dimension_numbers<[1], [0], [0], [1], [0, 0, 1, 1], [], []>} : vector<2x32xbf16>, vector<32x32xbf16>, vector<2x32xf32> -> vector<2x32xf32>
    %210 = vector.extract_strided_slice %0 {offsets = [7, 0], sizes = [1, 32], strides = [1, 1]} : vector<8x32xf32> to vector<1x32xf32>
    %211 = vector.shape_cast %210 : vector<1x32xf32> to vector<32xf32>
    %212 = vector.shape_cast %211 : vector<32xf32> to vector<1x32xf32>
    %213 = vector.broadcast %212 : vector<1x32xf32> to vector<2x32xf32>
    %214 = arith.addf %209, %213 : vector<2x32xf32>
    %c0_79 = arith.constant 0 : index
    %c0_80 = arith.constant 0 : index
    %215 = vector.load %arg3[%c0_79, %c0_80] : memref<2x32xf32, #tpu.memory_space<vmem>>, vector<2x32xf32>
    tpu.vector_store %arg3[%c0_79, %c0_80], %214 {strides = array<i32>} : memref<2x32xf32, #tpu.memory_space<vmem>>, vector<2x32xf32>,
    return
  }
}

</mosaic_0001>

<llo_original>
// kernel: branchnet_forward.1
$region0: #{branchnet_forward.1}
  #allocation0 [shape = 'u32[]', space=smem, size = 0x4, offset = 0x4, fixed_abs, tag = 'smem constant byte address 0x4 - core index']
  #allocation1 [shape = 'u32[144,128]{1,0:T(1,128)}', space=vmem, size = 0x12000, scoped, tag = 'internal scratch']
  %s0 = inlined_call_operand.vmem [shape: f32[32,16], index: 0, kind: input, shape index: {}]
  %s1 = inlined_call_operand.vmem [shape: bf16[632,32], index: 1, kind: input, shape index: {}]
  %s2 = inlined_call_operand.vmem [shape: f32[8,32], index: 2, kind: input, shape index: {}]
  %s3 = inlined_call_operand.hbm [shape: f32[2,32], index: 3, kind: output, shape index: {}]
  %s4 = sld [smem:[#allocation0]]
  $region22: #{branchnet_forward.1} parent=0
    _
  %s6 = ssub.s32 1, %s4
  %s7 = scalar_select 0, %s6, %s4
  $region1: #{branchnet_forward.1} parent=0
    #allocation2 [shape = 'u8[1024]{0}', space=vmem, size = 0x400, scoped, tag = 'output window, operand 0, single buffered']
    #allocation3 [shape = 's32[1]{0}', space=sflag, size = 0x4, scoped, tag = 'scoped memory for branchnet_forward.1']
    %8 = vsyncpa [#allocation3], 0
    // Predicated region
    $region2: #{branchnet_forward.1} parent=1 // pred_check
      _
    $region3: #{branchnet_forward.1} parent=1 // pred_check_branch
      %10 = sbr.rel (0) target = $region5
    $region4: #{branchnet_forward.1} parent=1 // pred_region
      _
    $region5: #{branchnet_forward.1} parent=1 // pred_fallthru
      _
    // Predicated region
    $region6: #{branchnet_forward.1} parent=1 // pred_check
      _
    $region7: #{branchnet_forward.1} parent=1 // pred_check_branch
      %12 = sbr.rel (0) target = $region9
    $region8: #{branchnet_forward.1} parent=1 // pred_region
      _
    $region9: #{branchnet_forward.1} parent=1 // pred_fallthru
      _
    // Predicated region
    $region10: #{branchnet_forward.1} parent=1 // pred_check
      _
    $region11: #{branchnet_forward.1} parent=1 // pred_check_branch
      %14 = sbr.rel (0) target = $region13
    $region12: #{branchnet_forward.1} parent=1 // pred_region
      _
    $region13: #{branchnet_forward.1} parent=1 // pred_fallthru
      _
    %v16 = vld [vmem:[%s2] sm:$0xff]
    %v17 = vld [vmem:[%s0] sm:$0xff]
    %v18 = vld [vmem:[%s0 + $0x8] sm:$0xff]
    %v19 = vld [vmem:[%s0 + $0x10] sm:$0xff]
    %v20 = vld [vmem:[%s0 + $0x18] sm:$0xff]
    %v21 = vpack.c.bf16 %v18, %v17
    %v22 = vpack.c.bf16 %v20, %v19
    %v23 = vld [vmem:[%s1] sm:$0xf]
    %v24 = vld [vmem:[%s1 + $0x4] sm:$0xf]
    %v25 = vlaneseq
    %v26 = vshrl.u32 %v25, 7
    %v27 = vsub.s32 0, %v26
    %v28 = vrot.slane %v16, %v27
    %v31 = vunpack.c.l.b16 %v23
    %v32 = vunpack.c.l.b16 %v24
    %v33 = vpack.c.b16 %v32, %v31
    %vm35 = vcmask 130048
    %v37 = vsel %vm35, %v21, 0
    %v40 = vsel %vm35, %v22, 0
    %42 = vmatprep.subr.bf16.mxu0 0
    %43 = vmatpush1.bf16.msra.mxu0 %v33
    %44 = vmatprep.subr.bf16.mxu0 0
    %45 = vmatpush1.bf16.msra.mxu0 0
    %46 = vmatprep.subr.bf16.mxu0 0
    %47 = vmatpush1.bf16.msra.mxu0 0
    %48 = vmatprep.subr.bf16.mxu0 0
    %49 = vmatpush1.bf16.msra.mxu0 0
    %50 = vmatprep.subr.bf16.mxu0 0
    %51 = vmatpush1.bf16.msra.mxu0 0
    %52 = vmatprep.subr.bf16.mxu0 0
    %53 = vmatpush1.bf16.msra.mxu0 0
    %54 = vmatprep.subr.bf16.mxu0 0
    %55 = vmatpush1.bf16.msra.mxu0 0
    %56 = vmatprep.subr.bf16.mxu0 0
    %57 = vmatpush1.bf16.msra.mxu0 0
    %58 = vmatprep.subr.bf16.mxu0 0
    %59 = vmatpush1.bf16.msra.mxu0 0
    %60 = vmatprep.subr.bf16.mxu0 0
    %61 = vmatpush1.bf16.msra.mxu0 0
    %62 = vmatprep.subr.bf16.mxu0 0
    %63 = vmatpush1.bf16.msra.mxu0 0
    %64 = vmatprep.subr.bf16.mxu0 0
    %65 = vmatpush1.bf16.msra.mxu0 0
    %66 = vmatprep.subr.bf16.mxu0 0
    %67 = vmatpush1.bf16.msra.mxu0 0
    %68 = vmatprep.subr.bf16.mxu0 0
    %69 = vmatpush1.bf16.msra.mxu0 0
    %70 = vmatprep.subr.bf16.mxu0 0
    %71 = vmatpush1.bf16.msra.mxu0 0
    %72 = vmatprep.subr.bf16.mxu0 0
    %73 = vmatpush1.bf16.msra.mxu0 0
    %74 = vmatprep.mubr.bf16.mxu0 0
    %75 = vmatmul.mubr.bf16.gmra.mrb[0].mxu0 %v37
    %v76 = vpop.f32.mrb[0].mxu0
    %v77 = vadd.f32 %v28, %v76
    %v78 = vpop.f32.mrb[0].mxu0
    %v79 = vpop.f32.mrb[0].mxu0
    %v80 = vadd.f32 %v28, %v79
    %v81 = vpop.f32.mrb[0].mxu0
    %82 = vmatprep.mubr.bf16.mxu0 0
    %83 = vmatmul.mubr.bf16.gmra.mrb[0].mxu0 %v40
    %v84 = vpop.f32.mrb[0].mxu0
    %v85 = vadd.f32 %v28, %v84
    %v86 = vpop.f32.mrb[0].mxu0
    %v87 = vpop.f32.mrb[0].mxu0
    %v88 = vadd.f32 %v28, %v87
    %v89 = vpop.f32.mrb[0].mxu0
    %90 = vdwg.mxu0
    %v91 = vmax.f32 %v77, 0.0
    %v92 = vmax.f32 %v80, 0.0
    %v93 = vmax.f32 %v85, 0.0
    %v94 = vmax.f32 %v88, 0.0
    %v95 = vlaneseq
    %v96 = vshrl.u32 %v95, 7
    %v97 = vadd.s32 %v96, 8
    %v98 = vadd.s32 %v96, 16
    %v99 = vadd.s32 %v96, 24
    %vm100 = vcmp.lt.s32.totalorder %v96, 0
    %v101 = vsub.s32 0, %v96
    %v102 = vsel %vm100, %v101, %v96
    %v103 = vshrl.u32 %v102, 4
    %v104 = vand.u32 %v102, 15
    %v105 = vsub.s32 0, %v104
    %v106 = vsel %vm100, %v105, %v104
    %vm107 = vcmp.lt.s32.totalorder %v97, 0
    %v108 = vsub.s32 0, %v97
    %v109 = vsel %vm107, %v108, %v97
    %v110 = vshrl.u32 %v109, 4
    %v111 = vand.u32 %v109, 15
    %v112 = vsub.s32 0, %v111
    %v113 = vsel %vm107, %v112, %v111
    %vm114 = vcmp.lt.s32.totalorder %v98, 0
    %v115 = vsub.s32 0, %v98
    %v116 = vsel %vm114, %v115, %v98
    %v117 = vshrl.u32 %v116, 4
    %v118 = vand.u32 %v116, 15
    %v119 = vsub.s32 0, %v118
    %v120 = vsel %vm114, %v119, %v118
    %vm121 = vcmp.lt.s32.totalorder %v99, 0
    %v122 = vsub.s32 0, %v99
    %v123 = vsel %vm121, %v122, %v99
    %v124 = vshrl.u32 %v123, 4
    %v125 = vand.u32 %v123, 15
    %v126 = vsub.s32 0, %v125
    %v127 = vsel %vm121, %v126, %v125
    %vm128 = vcmp.ne.s32.totalorder %v106, 0
    %vm129 = vcmp.ne.s32.totalorder %v113, 0
    %vm130 = vcmp.ne.s32.totalorder %v120, 0
    %vm131 = vcmp.ne.s32.totalorder %v127, 0
    %vm132 = vcmp.lt.s32.totalorder %v106, 0
    %vm133 = vcmp.lt.s32.totalorder %v113, 0
    %vm134 = vcmp.lt.s32.totalorder %v120, 0
    %vm135 = vcmp.lt.s32.totalorder %v127, 0
    %vm136 = vmand %vm132, %vm128
    %vm137 = vmand %vm133, %vm129
    %vm138 = vmand %vm134, %vm130
    %vm139 = vmand %vm135, %vm131
    %v140 = vadd.s32 %v106, 16
    %v141 = vadd.s32 %v113, 16
    %v142 = vadd.s32 %v120, 16
    %v143 = vadd.s32 %v127, 16
    %v144 = vsel %vm136, %v140, %v106
    %v145 = vsel %vm137, %v141, %v113
    %v146 = vsel %vm138, %v142, %v120
    %v147 = vsel %vm139, %v143, %v127
    %vm148 = vcmp.ge.s32.totalorder %v144, 1
    %vm149 = vcmp.ge.s32.totalorder %v145, 1
    %vm150 = vcmp.ge.s32.totalorder %v146, 1
    %vm151 = vcmp.ge.s32.totalorder %v147, 1
    %vm152 = vcmp.le.s32.totalorder %v144, 14
    %vm153 = vcmp.le.s32.totalorder %v145, 14
    %vm154 = vcmp.le.s32.totalorder %v146, 14
    %vm155 = vcmp.le.s32.totalorder %v147, 14
    %v156 = vpack.c.bf16 %v92, %v91
    %v157 = vpack.c.bf16 %v94, %v93
    %v158 = vld [vmem:[%s1 + $0x18] sm:$0xf]
    %v159 = vld [vmem:[%s1 + $0x1c] sm:$0xf]
    %v160 = vld [vmem:[%s1 + $0x20] sm:$0xf]
    %v161 = vld [vmem:[%s1 + $0x24] sm:$0xf]
    %v162 = vrot.slane %v91, 7
    %v163 = vrot.slane %v92, 7
    %v164 = vrot.slane %v93, 7
    %v165 = vrot.slane %v94, 7
    %vm166 = vcmp.lt.s32.totalorder %v96, 1
    %v167 = vsel %vm166, %v164, %v165
    %v168 = vsel %vm166, %v163, %v164
    %v169 = vsel %vm166, %v162, %v163
    %v170 = vsel %vm166, %v165, %v162
    %v171 = vsel %vm148, 1, 0
    %v172 = vsel %vm149, 1, 0
    %v173 = vsel %vm150, 1, 0
    %v174 = vsel %vm151, 1, 0
    %vm175 = vcmp.eq.s32.totalorder %v171, 1
    %vm176 = vcmp.eq.s32.totalorder %v172, 1
    %vm177 = vcmp.eq.s32.totalorder %v173, 1
    %vm178 = vcmp.eq.s32.totalorder %v174, 1
    %v179 = vsel %vm175, %v170, 0.0
    %v180 = vsel %vm176, %v169, 0.0
    %v181 = vsel %vm177, %v168, 0.0
    %v182 = vsel %vm178, %v167, 0.0
    %v183 = vpack.c.bf16 %v180, %v179
    %v184 = vpack.c.bf16 %v182, %v181
    %v185 = vld [vmem:[%s1 + $0x8] sm:$0xf]
    %v186 = vld [vmem:[%s1 + $0xc] sm:$0xf]
    %v187 = vld [vmem:[%s1 + $0x10] sm:$0xf]
    %v188 = vld [vmem:[%s1 + $0x14] sm:$0xf]
    %v193 = vunpack.c.l.b16 %v185
    %v194 = vunpack.c.l.b16 %v186
    %v195 = vunpack.c.l.b16 %v187
    %v196 = vunpack.c.l.b16 %v188
    %v197 = vpack.c.b16 %v194, %v193
    %v198 = vpack.c.b16 %v196, %v195
    %vm201 = vcmask 261120
    %v203 = vsel %vm201, %v183, 0
    %v206 = vsel %vm201, %v184, 0
    %208 = vmatprep.subr.bf16.mxu0 0
    %209 = vmatpush1.bf16.msra.mxu0 %v197
    %210 = vmatprep.subr.bf16.mxu0 0
    %211 = vmatpush1.bf16.msra.mxu0 %v198
    %212 = vmatprep.subr.bf16.mxu0 0
    %213 = vmatpush1.bf16.msra.mxu0 0
    %214 = vmatprep.subr.bf16.mxu0 0
    %215 = vmatpush1.bf16.msra.mxu0 0
    %216 = vmatprep.subr.bf16.mxu0 0
    %217 = vmatpush1.bf16.msra.mxu0 0
    %218 = vmatprep.subr.bf16.mxu0 0
    %219 = vmatpush1.bf16.msra.mxu0 0
    %220 = vmatprep.subr.bf16.mxu0 0
    %221 = vmatpush1.bf16.msra.mxu0 0
    %222 = vmatprep.subr.bf16.mxu0 0
    %223 = vmatpush1.bf16.msra.mxu0 0
    %224 = vmatprep.subr.bf16.mxu0 0
    %225 = vmatpush1.bf16.msra.mxu0 0
    %226 = vmatprep.subr.bf16.mxu0 0
    %227 = vmatpush1.bf16.msra.mxu0 0
    %228 = vmatprep.subr.bf16.mxu0 0
    %229 = vmatpush1.bf16.msra.mxu0 0
    %230 = vmatprep.subr.bf16.mxu0 0
    %231 = vmatpush1.bf16.msra.mxu0 0
    %232 = vmatprep.subr.bf16.mxu0 0
    %233 = vmatpush1.bf16.msra.mxu0 0
    %234 = vmatprep.subr.bf16.mxu0 0
    %235 = vmatpush1.bf16.msra.mxu0 0
    %236 = vmatprep.subr.bf16.mxu0 0
    %237 = vmatpush1.bf16.msra.mxu0 0
    %238 = vmatprep.subr.bf16.mxu0 0
    %239 = vmatpush1.bf16.msra.mxu0 0
    %240 = vmatprep.mubr.bf16.mxu0 0
    %241 = vmatmul.mubr.bf16.gmra.mrb[0].mxu0 %v203
    %v242 = vpop.f32.mrb[0].mxu0
    %v243 = vadd.f32 0.0, %v242
    %v244 = vpop.f32.mrb[0].mxu0
    %v245 = vpop.f32.mrb[0].mxu0
    %v246 = vadd.f32 0.0, %v245
    %v247 = vpop.f32.mrb[0].mxu0
    %248 = vmatprep.mubr.bf16.mxu0 0
    %249 = vmatmul.mubr.bf16.gmra.mrb[0].mxu0 %v206
    %v250 = vpop.f32.mrb[0].mxu0
    %v251 = vadd.f32 0.0, %v250
    %v252 = vpop.f32.mrb[0].mxu0
    %v253 = vpop.f32.mrb[0].mxu0
    %v254 = vadd.f32 0.0, %v253
    %v255 = vpop.f32.mrb[0].mxu0
    %256 = vdwg.mxu0
    %v261 = vunpack.c.l.b16 %v158
    %v262 = vunpack.c.l.b16 %v159
    %v263 = vunpack.c.l.b16 %v160
    %v264 = vunpack.c.l.b16 %v161
    %v265 = vpack.c.b16 %v262, %v261
    %v266 = vpack.c.b16 %v264, %v263
    %v270 = vsel %vm201, %v156, 0
    %v273 = vsel %vm201, %v157, 0
    %275 = vmatprep.subr.bf16.mxu0 0
    %276 = vmatpush1.bf16.msra.mxu0 %v265
    %277 = vmatprep.subr.bf16.mxu0 0
    %278 = vmatpush1.bf16.msra.mxu0 %v266
    %279 = vmatprep.subr.bf16.mxu0 0
    %280 = vmatpush1.bf16.msra.mxu0 0
    %281 = vmatprep.subr.bf16.mxu0 0
    %282 = vmatpush1.bf16.msra.mxu0 0
    %283 = vmatprep.subr.bf16.mxu0 0
    %284 = vmatpush1.bf16.msra.mxu0 0
    %285 = vmatprep.subr.bf16.mxu0 0
    %286 = vmatpush1.bf16.msra.mxu0 0
    %287 = vmatprep.subr.bf16.mxu0 0
    %288 = vmatpush1.bf16.msra.mxu0 0
    %289 = vmatprep.subr.bf16.mxu0 0
    %290 = vmatpush1.bf16.msra.mxu0 0
    %291 = vmatprep.subr.bf16.mxu0 0
    %292 = vmatpush1.bf16.msra.mxu0 0
    %293 = vmatprep.subr.bf16.mxu0 0
    %294 = vmatpush1.bf16.msra.mxu0 0
    %295 = vmatprep.subr.bf16.mxu0 0
    %296 = vmatpush1.bf16.msra.mxu0 0
    %297 = vmatprep.subr.bf16.mxu0 0
    %298 = vmatpush1.bf16.msra.mxu0 0
    %299 = vmatprep.subr.bf16.mxu0 0
    %300 = vmatpush1.bf16.msra.mxu0 0
    %301 = vmatprep.subr.bf16.mxu0 0
    %302 = vmatpush1.bf16.msra.mxu0 0
    %303 = vmatprep.subr.bf16.mxu0 0
    %304 = vmatpush1.bf16.msra.mxu0 0
    %305 = vmatprep.subr.bf16.mxu0 0
    %306 = vmatpush1.bf16.msra.mxu0 0
    %307 = vmatprep.mubr.bf16.mxu0 0
    %308 = vmatmul.mubr.bf16.gmra.mrb[0].mxu0 %v270
    %v309 = vpop.f32.mrb[0].mxu0
    %v310 = vadd.f32 %v243, %v309
    %v311 = vpop.f32.mrb[0].mxu0
    %v312 = vpop.f32.mrb[0].mxu0
    %v313 = vadd.f32 %v246, %v312
    %v314 = vpop.f32.mrb[0].mxu0
    %315 = vmatprep.mubr.bf16.mxu0 0
    %316 = vmatmul.mubr.bf16.gmra.mrb[0].mxu0 %v273
    %v317 = vpop.f32.mrb[0].mxu0
    %v318 = vadd.f32 %v251, %v317
    %v319 = vpop.f32.mrb[0].mxu0
    %v320 = vpop.f32.mrb[0].mxu0
    %v321 = vadd.f32 %v254, %v320
    %v322 = vpop.f32.mrb[0].mxu0
    %323 = vdwg.mxu0
    %v324 = vrot.slane %v91, 1
    %v325 = vrot.slane %v92, 1
    %v326 = vrot.slane %v93, 1
    %v327 = vrot.slane %v94, 1
    %vm328 = vcmp.lt.s32.totalorder %v96, 7
    %v329 = vsel %vm328, %v326, %v327
    %v330 = vsel %vm328, %v325, %v326
    %v331 = vsel %vm328, %v324, %v325
    %v332 = vsel %vm328, %v327, %v324
    %v333 = vsel %vm152, 1, 0
    %v334 = vsel %vm153, 1, 0
    %v335 = vsel %vm154, 1, 0
    %v336 = vsel %vm155, 1, 0
    %vm337 = vcmp.eq.s32.totalorder %v333, 1
    %vm338 = vcmp.eq.s32.totalorder %v334, 1
    %vm339 = vcmp.eq.s32.totalorder %v335, 1
    %vm340 = vcmp.eq.s32.totalorder %v336, 1
    %v341 = vsel %vm337, %v331, 0.0
    %v342 = vsel %vm338, %v330, 0.0
    %v343 = vsel %vm339, %v329, 0.0
    %v344 = vsel %vm340, %v332, 0.0
    %v345 = vpack.c.bf16 %v342, %v341
    %v346 = vpack.c.bf16 %v344, %v343
    %v347 = vld [vmem:[%s1 + $0x28] sm:$0xf]
    %v348 = vld [vmem:[%s1 + $0x2c] sm:$0xf]
    %v349 = vld [vmem:[%s1 + $0x30] sm:$0xf]
    %v350 = vld [vmem:[%s1 + $0x34] sm:$0xf]
    %v355 = vunpack.c.l.b16 %v347
    %v356 = vunpack.c.l.b16 %v348
    %v357 = vunpack.c.l.b16 %v349
    %v358 = vunpack.c.l.b16 %v350
    %v359 = vpack.c.b16 %v356, %v355
    %v360 = vpack.c.b16 %v358, %v357
    %v364 = vsel %vm201, %v345, 0
    %v367 = vsel %vm201, %v346, 0
    %369 = vmatprep.subr.bf16.mxu0 0
    %370 = vmatpush1.bf16.msra.mxu0 %v359
    %371 = vmatprep.subr.bf16.mxu0 0
    %372 = vmatpush1.bf16.msra.mxu0 %v360
    %373 = vmatprep.subr.bf16.mxu0 0
    %374 = vmatpush1.bf16.msra.mxu0 0
    %375 = vmatprep.subr.bf16.mxu0 0
    %376 = vmatpush1.bf16.msra.mxu0 0
    %377 = vmatprep.subr.bf16.mxu0 0
    %378 = vmatpush1.bf16.msra.mxu0 0
    %379 = vmatprep.subr.bf16.mxu0 0
    %380 = vmatpush1.bf16.msra.mxu0 0
    %381 = vmatprep.subr.bf16.mxu0 0
    %382 = vmatpush1.bf16.msra.mxu0 0
    %383 = vmatprep.subr.bf16.mxu0 0
    %384 = vmatpush1.bf16.msra.mxu0 0
    %385 = vmatprep.subr.bf16.mxu0 0
    %386 = vmatpush1.bf16.msra.mxu0 0
    %387 = vmatprep.subr.bf16.mxu0 0
    %388 = vmatpush1.bf16.msra.mxu0 0
    %389 = vmatprep.subr.bf16.mxu0 0
    %390 = vmatpush1.bf16.msra.mxu0 0
    %391 = vmatprep.subr.bf16.mxu0 0
    %392 = vmatpush1.bf16.msra.mxu0 0
    %393 = vmatprep.subr.bf16.mxu0 0
    %394 = vmatpush1.bf16.msra.mxu0 0
    %395 = vmatprep.subr.bf16.mxu0 0
    %396 = vmatpush1.bf16.msra.mxu0 0
    %397 = vmatprep.subr.bf16.mxu0 0
    %398 = vmatpush1.bf16.msra.mxu0 0
    %399 = vmatprep.subr.bf16.mxu0 0
    %400 = vmatpush1.bf16.msra.mxu0 0
    %401 = vmatprep.mubr.bf16.mxu0 0
    %402 = vmatmul.mubr.bf16.gmra.mrb[0].mxu0 %v364
    %v403 = vpop.f32.mrb[0].mxu0
    %v404 = vadd.f32 0.0, %v403
    %v405 = vpop.f32.mrb[0].mxu0
    %v406 = vpop.f32.mrb[0].mxu0
    %v407 = vadd.f32 0.0, %v406
    %v408 = vpop.f32.mrb[0].mxu0
    %409 = vmatprep.mubr.bf16.mxu0 0
    %410 = vmatmul.mubr.bf16.gmra.mrb[0].mxu0 %v367
    %v411 = vpop.f32.mrb[0].mxu0
    %v412 = vadd.f32 0.0, %v411
    %v413 = vpop.f32.mrb[0].mxu0
    %v414 = vpop.f32.mrb[0].mxu0
    %v415 = vadd.f32 0.0, %v414
    %v416 = vpop.f32.mrb[0].mxu0
    %417 = vdwg.mxu0
    %v418 = vadd.f32 %v310, %v404
    %v419 = vadd.f32 %v313, %v407
    %v420 = vadd.f32 %v318, %v412
    %v421 = vadd.f32 %v321, %v415
    %v422 = vlaneseq
    %v423 = vshrl.u32 %v422, 7
    %v424 = vsub.s32 1, %v423
    %v425 = vrot.slane %v16, %v424
    %v426 = vadd.f32 %v418, %v425
    %v427 = vadd.f32 %v419, %v425
    %v428 = vadd.f32 %v420, %v425
    %v429 = vadd.f32 %v421, %v425
    %v430 = vmax.f32 %v426, 0.0
    %v431 = vmax.f32 %v427, 0.0
    %v432 = vmax.f32 %v428, 0.0
    %v433 = vmax.f32 %v429, 0.0
    %v434 = vpack.c.bf16 %v431, %v430
    %v435 = vpack.c.bf16 %v433, %v432
    %v436 = vld [vmem:[%s1 + $0x48] sm:$0xf]
    %v437 = vld [vmem:[%s1 + $0x4c] sm:$0xf]
    %v438 = vld [vmem:[%s1 + $0x50] sm:$0xf]
    %v439 = vld [vmem:[%s1 + $0x54] sm:$0xf]
    %v440 = vrot.slane %v430, 7
    %v441 = vrot.slane %v431, 7
    %v442 = vrot.slane %v432, 7
    %v443 = vrot.slane %v433, 7
    %v444 = vsel %vm166, %v442, %v443
    %v445 = vsel %vm166, %v441, %v442
    %v446 = vsel %vm166, %v440, %v441
    %v447 = vsel %vm166, %v443, %v440
    %v448 = vsel %vm175, %v447, 0.0
    %v449 = vsel %vm176, %v446, 0.0
    %v450 = vsel %vm177, %v445, 0.0
    %v451 = vsel %vm178, %v444, 0.0
    %v452 = vpack.c.bf16 %v449, %v448
    %v453 = vpack.c.bf16 %v451, %v450
    %v454 = vld [vmem:[%s1 + $0x38] sm:$0xf]
    %v455 = vld [vmem:[%s1 + $0x3c] sm:$0xf]
    %v456 = vld [vmem:[%s1 + $0x40] sm:$0xf]
    %v457 = vld [vmem:[%s1 + $0x44] sm:$0xf]
    %v462 = vunpack.c.l.b16 %v454
    %v463 = vunpack.c.l.b16 %v455
    %v464 = vunpack.c.l.b16 %v456
    %v465 = vunpack.c.l.b16 %v457
    %v466 = vpack.c.b16 %v463, %v462
    %v467 = vpack.c.b16 %v465, %v464
    %v471 = vsel %vm201, %v452, 0
    %v474 = vsel %vm201, %v453, 0
    %476 = vmatprep.subr.bf16.mxu0 0
    %477 = vmatpush1.bf16.msra.mxu0 %v466
    %478 = vmatprep.subr.bf16.mxu0 0
    %479 = vmatpush1.bf16.msra.mxu0 %v467
    %480 = vmatprep.subr.bf16.mxu0 0
    %481 = vmatpush1.bf16.msra.mxu0 0
    %482 = vmatprep.subr.bf16.mxu0 0
    %483 = vmatpush1.bf16.msra.mxu0 0
    %484 = vmatprep.subr.bf16.mxu0 0
    %485 = vmatpush1.bf16.msra.mxu0 0
    %486 = vmatprep.subr.bf16.mxu0 0
    %487 = vmatpush1.bf16.msra.mxu0 0
    %488 = vmatprep.subr.bf16.mxu0 0
    %489 = vmatpush1.bf16.msra.mxu0 0
    %490 = vmatprep.subr.bf16.mxu0 0
    %491 = vmatpush1.bf16.msra.mxu0 0
    %492 = vmatprep.subr.bf16.mxu0 0
    %493 = vmatpush1.bf16.msra.mxu0 0
    %494 = vmatprep.subr.bf16.mxu0 0
    %495 = vmatpush1.bf16.msra.mxu0 0
    %496 = vmatprep.subr.bf16.mxu0 0
    %497 = vmatpush1.bf16.msra.mxu0 0
    %498 = vmatprep.subr.bf16.mxu0 0
    %499 = vmatpush1.bf16.msra.mxu0 0
    %500 = vmatprep.subr.bf16.mxu0 0
    %501 = vmatpush1.bf16.msra.mxu0 0
    %502 = vmatprep.subr.bf16.mxu0 0
    %503 = vmatpush1.bf16.msra.mxu0 0
    %504 = vmatprep.subr.bf16.mxu0 0
    %505 = vmatpush1.bf16.msra.mxu0 0
    %506 = vmatprep.subr.bf16.mxu0 0
    %507 = vmatpush1.bf16.msra.mxu0 0
    %508 = vmatprep.mubr.bf16.mxu0 0
    %509 = vmatmul.mubr.bf16.gmra.mrb[0].mxu0 %v471
    %v510 = vpop.f32.mrb[0].mxu0
    %v511 = vadd.f32 0.0, %v510
    %v512 = vpop.f32.mrb[0].mxu0
    %v513 = vpop.f32.mrb[0].mxu0
    %v514 = vadd.f32 0.0, %v513
    %v515 = vpop.f32.mrb[0].mxu0
    %516 = vmatprep.mubr.bf16.mxu0 0
    %517 = vmatmul.mubr.bf16.gmra.mrb[0].mxu0 %v474
    %v518 = vpop.f32.mrb[0].mxu0
    %v519 = vadd.f32 0.0, %v518
    %v520 = vpop.f32.mrb[0].mxu0
    %v521 = vpop.f32.mrb[0].mxu0
    %v522 = vadd.f32 0.0, %v521
    %v523 = vpop.f32.mrb[0].mxu0
    %524 = vdwg.mxu0
    %v529 = vunpack.c.l.b16 %v436
    %v530 = vunpack.c.l.b16 %v437
    %v531 = vunpack.c.l.b16 %v438
    %v532 = vunpack.c.l.b16 %v439
    %v533 = vpack.c.b16 %v530, %v529
    %v534 = vpack.c.b16 %v532, %v531
    %v538 = vsel %vm201, %v434, 0
    %v541 = vsel %vm201, %v435, 0
    %543 = vmatprep.subr.bf16.mxu0 0
    %544 = vmatpush1.bf16.msra.mxu0 %v533
    %545 = vmatprep.subr.bf16.mxu0 0
    %546 = vmatpush1.bf16.msra.mxu0 %v534
    %547 = vmatprep.subr.bf16.mxu0 0
    %548 = vmatpush1.bf16.msra.mxu0 0
    %549 = vmatprep.subr.bf16.mxu0 0
    %550 = vmatpush1.bf16.msra.mxu0 0
    %551 = vmatprep.subr.bf16.mxu0 0
    %552 = vmatpush1.bf16.msra.mxu0 0
    %553 = vmatprep.subr.bf16.mxu0 0
    %554 = vmatpush1.bf16.msra.mxu0 0
    %555 = vmatprep.subr.bf16.mxu0 0
    %556 = vmatpush1.bf16.msra.mxu0 0
    %557 = vmatprep.subr.bf16.mxu0 0
    %558 = vmatpush1.bf16.msra.mxu0 0
    %559 = vmatprep.subr.bf16.mxu0 0
    %560 = vmatpush1.bf16.msra.mxu0 0
    %561 = vmatprep.subr.bf16.mxu0 0
    %562 = vmatpush1.bf16.msra.mxu0 0
    %563 = vmatprep.subr.bf16.mxu0 0
    %564 = vmatpush1.bf16.msra.mxu0 0
    %565 = vmatprep.subr.bf16.mxu0 0
    %566 = vmatpush1.bf16.msra.mxu0 0
    %567 = vmatprep.subr.bf16.mxu0 0
    %568 = vmatpush1.bf16.msra.mxu0 0
    %569 = vmatprep.subr.bf16.mxu0 0
    %570 = vmatpush1.bf16.msra.mxu0 0
    %571 = vmatprep.subr.bf16.mxu0 0
    %572 = vmatpush1.bf16.msra.mxu0 0
    %573 = vmatprep.subr.bf16.mxu0 0
    %574 = vmatpush1.bf16.msra.mxu0 0
    %575 = vmatprep.mubr.bf16.mxu0 0
    %576 = vmatmul.mubr.bf16.gmra.mrb[0].mxu0 %v538
    %v577 = vpop.f32.mrb[0].mxu0
    %v578 = vadd.f32 %v511, %v577
    %v579 = vpop.f32.mrb[0].mxu0
    %v580 = vpop.f32.mrb[0].mxu0
    %v581 = vadd.f32 %v514, %v580
    %v582 = vpop.f32.mrb[0].mxu0
    %583 = vmatprep.mubr.bf16.mxu0 0
    %584 = vmatmul.mubr.bf16.gmra.mrb[0].mxu0 %v541
    %v585 = vpop.f32.mrb[0].mxu0
    %v586 = vadd.f32 %v519, %v585
    %v587 = vpop.f32.mrb[0].mxu0
    %v588 = vpop.f32.mrb[0].mxu0
    %v589 = vadd.f32 %v522, %v588
    %v590 = vpop.f32.mrb[0].mxu0
    %591 = vdwg.mxu0
    %v592 = vrot.slane %v430, 1
    %v593 = vrot.slane %v431, 1
    %v594 = vrot.slane %v432, 1
    %v595 = vrot.slane %v433, 1
    %v596 = vsel %vm328, %v594, %v595
    %v597 = vsel %vm328, %v593, %v594
    %v598 = vsel %vm328, %v592, %v593
    %v599 = vsel %vm328, %v595, %v592
    %v600 = vsel %vm337, %v598, 0.0
    %v601 = vsel %vm338, %v597, 0.0
    %v602 = vsel %vm339, %v596, 0.0
    %v603 = vsel %vm340, %v599, 0.0
    %v604 = vpack.c.bf16 %v601, %v600
    %v605 = vpack.c.bf16 %v603, %v602
    %v606 = vld [vmem:[%s1 + $0x58] sm:$0xf]
    %v607 = vld [vmem:[%s1 + $0x5c] sm:$0xf]
    %v608 = vld [vmem:[%s1 + $0x60] sm:$0xf]
    %v609 = vld [vmem:[%s1 + $0x64] sm:$0xf]
    %v614 = vunpack.c.l.b16 %v606
    %v615 = vunpack.c.l.b16 %v607
    %v616 = vunpack.c.l.b16 %v608
    %v617 = vunpack.c.l.b16 %v609
    %v618 = vpack.c.b16 %v615, %v614
    %v619 = vpack.c.b16 %v617, %v616
    %v623 = vsel %vm201, %v604, 0
    %v626 = vsel %vm201, %v605, 0
    %628 = vmatprep.subr.bf16.mxu0 0
    %629 = vmatpush1.bf16.msra.mxu0 %v618
    %630 = vmatprep.subr.bf16.mxu0 0
    %631 = vmatpush1.bf16.msra.mxu0 %v619
    %632 = vmatprep.subr.bf16.mxu0 0
    %633 = vmatpush1.bf16.msra.mxu0 0
    %634 = vmatprep.subr.bf16.mxu0 0
    %635 = vmatpush1.bf16.msra.mxu0 0
    %636 = vmatprep.subr.bf16.mxu0 0
    %637 = vmatpush1.bf16.msra.mxu0 0
    %638 = vmatprep.subr.bf16.mxu0 0
    %639 = vmatpush1.bf16.msra.mxu0 0
    %640 = vmatprep.subr.bf16.mxu0 0
    %641 = vmatpush1.bf16.msra.mxu0 0
    %642 = vmatprep.subr.bf16.mxu0 0
    %643 = vmatpush1.bf16.msra.mxu0 0
    %644 = vmatprep.subr.bf16.mxu0 0
    %645 = vmatpush1.bf16.msra.mxu0 0
    %646 = vmatprep.subr.bf16.mxu0 0
    %647 = vmatpush1.bf16.msra.mxu0 0
    %648 = vmatprep.subr.bf16.mxu0 0
    %649 = vmatpush1.bf16.msra.mxu0 0
    %650 = vmatprep.subr.bf16.mxu0 0
    %651 = vmatpush1.bf16.msra.mxu0 0
    %652 = vmatprep.subr.bf16.mxu0 0
    %653 = vmatpush1.bf16.msra.mxu0 0
    %654 = vmatprep.subr.bf16.mxu0 0
    %655 = vmatpush1.bf16.msra.mxu0 0
    %656 = vmatprep.subr.bf16.mxu0 0
    %657 = vmatpush1.bf16.msra.mxu0 0
    %658 = vmatprep.subr.bf16.mxu0 0
    %659 = vmatpush1.bf16.msra.mxu0 0
    %660 = vmatprep.mubr.bf16.mxu0 0
    %661 = vmatmul.mubr.bf16.gmra.mrb[0].mxu0 %v623
    %v662 = vpop.f32.mrb[0].mxu0
    %v663 = vadd.f32 0.0, %v662
    %v664 = vpop.f32.mrb[0].mxu0
    %v665 = vpop.f32.mrb[0].mxu0
    %v666 = vadd.f32 0.0, %v665
    %v667 = vpop.f32.mrb[0].mxu0
    %668 = vmatprep.mubr.bf16.mxu0 0
    %669 = vmatmul.mubr.bf16.gmra.mrb[0].mxu0 %v626
    %v670 = vpop.f32.mrb[0].mxu0
    %v671 = vadd.f32 0.0, %v670
    %v672 = vpop.f32.mrb[0].mxu0
    %v673 = vpop.f32.mrb[0].mxu0
    %v674 = vadd.f32 0.0, %v673
    %v675 = vpop.f32.mrb[0].mxu0
    %676 = vdwg.mxu0
    %v677 = vadd.f32 %v578, %v663
    %v678 = vadd.f32 %v581, %v666
    %v679 = vadd.f32 %v586, %v671
    %v680 = vadd.f32 %v589, %v674
    %v681 = vlaneseq
    %v682 = vshrl.u32 %v681, 7
    %v683 = vsub.s32 2, %v682
    %v684 = vrot.slane %v16, %v683
    %v685 = vadd.f32 %v677, %v684
    %v686 = vadd.f32 %v678, %v684
    %v687 = vadd.f32 %v679, %v684
    %v688 = vadd.f32 %v680, %v684
    %v689 = vadd.f32 %v685, %v91
    %v690 = vadd.f32 %v686, %v92
    %v691 = vadd.f32 %v687, %v93
    %v692 = vadd.f32 %v688, %v94
    %v693 = vmax.f32 %v689, 0.0
    %v694 = vmax.f32 %v690, 0.0
    %v695 = vmax.f32 %v691, 0.0
    %v696 = vmax.f32 %v692, 0.0
    %v697 = vpack.c.bf16 %v694, %v693
    %v698 = vpack.c.bf16 %v696, %v695
    %v699 = vld [vmem:[%s1 + $0x78] sm:$0xf]
    %v700 = vld [vmem:[%s1 + $0x7c] sm:$0xf]
    %v701 = vld [vmem:[%s1 + $0x80] sm:$0xf]
    %v702 = vld [vmem:[%s1 + $0x84] sm:$0xf]
    %v703 = vrot.slane %v693, 7
    %v704 = vrot.slane %v694, 7
    %v705 = vrot.slane %v695, 7
    %v706 = vrot.slane %v696, 7
    %v707 = vsel %vm166, %v705, %v706
    %v708 = vsel %vm166, %v704, %v705
    %v709 = vsel %vm166, %v703, %v704
    %v710 = vsel %vm166, %v706, %v703
    %v711 = vsel %vm175, %v710, 0.0
    %v712 = vsel %vm176, %v709, 0.0
    %v713 = vsel %vm177, %v708, 0.0
    %v714 = vsel %vm178, %v707, 0.0
    %v715 = vpack.c.bf16 %v712, %v711
    %v716 = vpack.c.bf16 %v714, %v713
    %v717 = vld [vmem:[%s1 + $0x68] sm:$0xf]
    %v718 = vld [vmem:[%s1 + $0x6c] sm:$0xf]
    %v719 = vld [vmem:[%s1 + $0x70] sm:$0xf]
    %v720 = vld [vmem:[%s1 + $0x74] sm:$0xf]
    %v725 = vunpack.c.l.b16 %v717
    %v726 = vunpack.c.l.b16 %v718
    %v727 = vunpack.c.l.b16 %v719
    %v728 = vunpack.c.l.b16 %v720
    %v729 = vpack.c.b16 %v726, %v725
    %v730 = vpack.c.b16 %v728, %v727
    %v734 = vsel %vm201, %v715, 0
    %v737 = vsel %vm201, %v716, 0
    %739 = vmatprep.subr.bf16.mxu0 0
    %740 = vmatpush1.bf16.msra.mxu0 %v729
    %741 = vmatprep.subr.bf16.mxu0 0
    %742 = vmatpush1.bf16.msra.mxu0 %v730
    %743 = vmatprep.subr.bf16.mxu0 0
    %744 = vmatpush1.bf16.msra.mxu0 0
    %745 = vmatprep.subr.bf16.mxu0 0
    %746 = vmatpush1.bf16.msra.mxu0 0
    %747 = vmatprep.subr.bf16.mxu0 0
    %748 = vmatpush1.bf16.msra.mxu0 0
    %749 = vmatprep.subr.bf16.mxu0 0
    %750 = vmatpush1.bf16.msra.mxu0 0
    %751 = vmatprep.subr.bf16.mxu0 0
    %752 = vmatpush1.bf16.msra.mxu0 0
    %753 = vmatprep.subr.bf16.mxu0 0
    %754 = vmatpush1.bf16.msra.mxu0 0
    %755 = vmatprep.subr.bf16.mxu0 0
    %756 = vmatpush1.bf16.msra.mxu0 0
    %757 = vmatprep.subr.bf16.mxu0 0
    %758 = vmatpush1.bf16.msra.mxu0 0
    %759 = vmatprep.subr.bf16.mxu0 0
    %760 = vmatpush1.bf16.msra.mxu0 0
    %761 = vmatprep.subr.bf16.mxu0 0
    %762 = vmatpush1.bf16.msra.mxu0 0
    %763 = vmatprep.subr.bf16.mxu0 0
    %764 = vmatpush1.bf16.msra.mxu0 0
    %765 = vmatprep.subr.bf16.mxu0 0
    %766 = vmatpush1.bf16.msra.mxu0 0
    %767 = vmatprep.subr.bf16.mxu0 0
    %768 = vmatpush1.bf16.msra.mxu0 0
    %769 = vmatprep.subr.bf16.mxu0 0
    %770 = vmatpush1.bf16.msra.mxu0 0
    %771 = vmatprep.mubr.bf16.mxu0 0
    %772 = vmatmul.mubr.bf16.gmra.mrb[0].mxu0 %v734
    %v773 = vpop.f32.mrb[0].mxu0
    %v774 = vadd.f32 0.0, %v773
    %v775 = vpop.f32.mrb[0].mxu0
    %v776 = vpop.f32.mrb[0].mxu0
    %v777 = vadd.f32 0.0, %v776
    %v778 = vpop.f32.mrb[0].mxu0
    %779 = vmatprep.mubr.bf16.mxu0 0
    %780 = vmatmul.mubr.bf16.gmra.mrb[0].mxu0 %v737
    %v781 = vpop.f32.mrb[0].mxu0
    %v782 = vadd.f32 0.0, %v781
    %v783 = vpop.f32.mrb[0].mxu0
    %v784 = vpop.f32.mrb[0].mxu0
    %v785 = vadd.f32 0.0, %v784
    %v786 = vpop.f32.mrb[0].mxu0
    %787 = vdwg.mxu0
    %v792 = vunpack.c.l.b16 %v699
    %v793 = vunpack.c.l.b16 %v700
    %v794 = vunpack.c.l.b16 %v701
    %v795 = vunpack.c.l.b16 %v702
    %v796 = vpack.c.b16 %v793, %v792
    %v797 = vpack.c.b16 %v795, %v794
    %v801 = vsel %vm201, %v697, 0
    %v804 = vsel %vm201, %v698, 0
    %806 = vmatprep.subr.bf16.mxu0 0
    %807 = vmatpush1.bf16.msra.mxu0 %v796
    %808 = vmatprep.subr.bf16.mxu0 0
    %809 = vmatpush1.bf16.msra.mxu0 %v797
    %810 = vmatprep.subr.bf16.mxu0 0
    %811 = vmatpush1.bf16.msra.mxu0 0
    %812 = vmatprep.subr.bf16.mxu0 0
    %813 = vmatpush1.bf16.msra.mxu0 0
    %814 = vmatprep.subr.bf16.mxu0 0
    %815 = vmatpush1.bf16.msra.mxu0 0
    %816 = vmatprep.subr.bf16.mxu0 0
    %817 = vmatpush1.bf16.msra.mxu0 0
    %818 = vmatprep.subr.bf16.mxu0 0
    %819 = vmatpush1.bf16.msra.mxu0 0
    %820 = vmatprep.subr.bf16.mxu0 0
    %821 = vmatpush1.bf16.msra.mxu0 0
    %822 = vmatprep.subr.bf16.mxu0 0
    %823 = vmatpush1.bf16.msra.mxu0 0
    %824 = vmatprep.subr.bf16.mxu0 0
    %825 = vmatpush1.bf16.msra.mxu0 0
    %826 = vmatprep.subr.bf16.mxu0 0
    %827 = vmatpush1.bf16.msra.mxu0 0
    %828 = vmatprep.subr.bf16.mxu0 0
    %829 = vmatpush1.bf16.msra.mxu0 0
    %830 = vmatprep.subr.bf16.mxu0 0
    %831 = vmatpush1.bf16.msra.mxu0 0
    %832 = vmatprep.subr.bf16.mxu0 0
    %833 = vmatpush1.bf16.msra.mxu0 0
    %834 = vmatprep.subr.bf16.mxu0 0
    %835 = vmatpush1.bf16.msra.mxu0 0
    %836 = vmatprep.subr.bf16.mxu0 0
    %837 = vmatpush1.bf16.msra.mxu0 0
    %838 = vmatprep.mubr.bf16.mxu0 0
    %839 = vmatmul.mubr.bf16.gmra.mrb[0].mxu0 %v801
    %v840 = vpop.f32.mrb[0].mxu0
    %v841 = vadd.f32 %v774, %v840
    %v842 = vpop.f32.mrb[0].mxu0
    %v843 = vpop.f32.mrb[0].mxu0
    %v844 = vadd.f32 %v777, %v843
    %v845 = vpop.f32.mrb[0].mxu0
    %846 = vmatprep.mubr.bf16.mxu0 0
    %847 = vmatmul.mubr.bf16.gmra.mrb[0].mxu0 %v804
    %v848 = vpop.f32.mrb[0].mxu0
    %v849 = vadd.f32 %v782, %v848
    %v850 = vpop.f32.mrb[0].mxu0
    %v851 = vpop.f32.mrb[0].mxu0
    %v852 = vadd.f32 %v785, %v851
    %v853 = vpop.f32.mrb[0].mxu0
    %854 = vdwg.mxu0
    %v855 = vrot.slane %v693, 1
    %v856 = vrot.slane %v694, 1
    %v857 = vrot.slane %v695, 1
    %v858 = vrot.slane %v696, 1
    %v859 = vsel %vm328, %v857, %v858
    %v860 = vsel %vm328, %v856, %v857
    %v861 = vsel %vm328, %v855, %v856
    %v862 = vsel %vm328, %v858, %v855
    %v863 = vsel %vm337, %v861, 0.0
    %v864 = vsel %vm338, %v860, 0.0
    %v865 = vsel %vm339, %v859, 0.0
    %v866 = vsel %vm340, %v862, 0.0
    %v867 = vpack.c.bf16 %v864, %v863
    %v868 = vpack.c.bf16 %v866, %v865
    %v869 = vld [vmem:[%s1 + $0x88] sm:$0xf]
    %v870 = vld [vmem:[%s1 + $0x8c] sm:$0xf]
    %v871 = vld [vmem:[%s1 + $0x90] sm:$0xf]
    %v872 = vld [vmem:[%s1 + $0x94] sm:$0xf]
    %v877 = vunpack.c.l.b16 %v869
    %v878 = vunpack.c.l.b16 %v870
    %v879 = vunpack.c.l.b16 %v871
    %v880 = vunpack.c.l.b16 %v872
    %v881 = vpack.c.b16 %v878, %v877
    %v882 = vpack.c.b16 %v880, %v879
    %v886 = vsel %vm201, %v867, 0
    %v889 = vsel %vm201, %v868, 0
    %891 = vmatprep.subr.bf16.mxu0 0
    %892 = vmatpush1.bf16.msra.mxu0 %v881
    %893 = vmatprep.subr.bf16.mxu0 0
    %894 = vmatpush1.bf16.msra.mxu0 %v882
    %895 = vmatprep.subr.bf16.mxu0 0
    %896 = vmatpush1.bf16.msra.mxu0 0
    %897 = vmatprep.subr.bf16.mxu0 0
    %898 = vmatpush1.bf16.msra.mxu0 0
    %899 = vmatprep.subr.bf16.mxu0 0
    %900 = vmatpush1.bf16.msra.mxu0 0
    %901 = vmatprep.subr.bf16.mxu0 0
    %902 = vmatpush1.bf16.msra.mxu0 0
    %903 = vmatprep.subr.bf16.mxu0 0
    %904 = vmatpush1.bf16.msra.mxu0 0
    %905 = vmatprep.subr.bf16.mxu0 0
    %906 = vmatpush1.bf16.msra.mxu0 0
    %907 = vmatprep.subr.bf16.mxu0 0
    %908 = vmatpush1.bf16.msra.mxu0 0
    %909 = vmatprep.subr.bf16.mxu0 0
    %910 = vmatpush1.bf16.msra.mxu0 0
    %911 = vmatprep.subr.bf16.mxu0 0
    %912 = vmatpush1.bf16.msra.mxu0 0
    %913 = vmatprep.subr.bf16.mxu0 0
    %914 = vmatpush1.bf16.msra.mxu0 0
    %915 = vmatprep.subr.bf16.mxu0 0
    %916 = vmatpush1.bf16.msra.mxu0 0
    %917 = vmatprep.subr.bf16.mxu0 0
    %918 = vmatpush1.bf16.msra.mxu0 0
    %919 = vmatprep.subr.bf16.mxu0 0
    %920 = vmatpush1.bf16.msra.mxu0 0
    %921 = vmatprep.subr.bf16.mxu0 0
    %922 = vmatpush1.bf16.msra.mxu0 0
    %923 = vmatprep.mubr.bf16.mxu0 0
    %924 = vmatmul.mubr.bf16.gmra.mrb[0].mxu0 %v886
    %v925 = vpop.f32.mrb[0].mxu0
    %v926 = vadd.f32 0.0, %v925
    %v927 = vpop.f32.mrb[0].mxu0
    %v928 = vpop.f32.mrb[0].mxu0
    %v929 = vadd.f32 0.0, %v928
    %v930 = vpop.f32.mrb[0].mxu0
    %931 = vmatprep.mubr.bf16.mxu0 0
    %932 = vmatmul.mubr.bf16.gmra.mrb[0].mxu0 %v889
    %v933 = vpop.f32.mrb[0].mxu0
    %v934 = vadd.f32 0.0, %v933
    %v935 = vpop.f32.mrb[0].mxu0
    %v936 = vpop.f32.mrb[0].mxu0
    %v937 = vadd.f32 0.0, %v936
    %v938 = vpop.f32.mrb[0].mxu0
    %939 = vdwg.mxu0
    %v940 = vadd.f32 %v841, %v926
    %v941 = vadd.f32 %v844, %v929
    %v942 = vadd.f32 %v849, %v934
    %v943 = vadd.f32 %v852, %v937
    %v944 = vlaneseq
    %v945 = vshrl.u32 %v944, 7
    %v946 = vsub.s32 3, %v945
    %v947 = vrot.slane %v16, %v946
    %v948 = vadd.f32 %v940, %v947
    %v949 = vadd.f32 %v941, %v947
    %v950 = vadd.f32 %v942, %v947
    %v951 = vadd.f32 %v943, %v947
    %v952 = vmax.f32 %v948, 0.0
    %v953 = vmax.f32 %v949, 0.0
    %v954 = vmax.f32 %v950, 0.0
    %v955 = vmax.f32 %v951, 0.0
    %v956 = vpack.c.bf16 %v953, %v952
    %v957 = vpack.c.bf16 %v955, %v954
    %v958 = vld [vmem:[%s1 + $0xa8] sm:$0xf]
    %v959 = vld [vmem:[%s1 + $0xac] sm:$0xf]
    %v960 = vld [vmem:[%s1 + $0xb0] sm:$0xf]
    %v961 = vld [vmem:[%s1 + $0xb4] sm:$0xf]
    %v962 = vrot.slane %v952, 7
    %v963 = vrot.slane %v953, 7
    %v964 = vrot.slane %v954, 7
    %v965 = vrot.slane %v955, 7
    %v966 = vsel %vm166, %v964, %v965
    %v967 = vsel %vm166, %v963, %v964
    %v968 = vsel %vm166, %v962, %v963
    %v969 = vsel %vm166, %v965, %v962
    %v970 = vsel %vm175, %v969, 0.0
    %v971 = vsel %vm176, %v968, 0.0
    %v972 = vsel %vm177, %v967, 0.0
    %v973 = vsel %vm178, %v966, 0.0
    %v974 = vpack.c.bf16 %v971, %v970
    %v975 = vpack.c.bf16 %v973, %v972
    %v976 = vld [vmem:[%s1 + $0x98] sm:$0xf]
    %v977 = vld [vmem:[%s1 + $0x9c] sm:$0xf]
    %v978 = vld [vmem:[%s1 + $0xa0] sm:$0xf]
    %v979 = vld [vmem:[%s1 + $0xa4] sm:$0xf]
    %v984 = vunpack.c.l.b16 %v976
    %v985 = vunpack.c.l.b16 %v977
    %v986 = vunpack.c.l.b16 %v978
    %v987 = vunpack.c.l.b16 %v979
    %v988 = vpack.c.b16 %v985, %v984
    %v989 = vpack.c.b16 %v987, %v986
    %v993 = vsel %vm201, %v974, 0
    %v996 = vsel %vm201, %v975, 0
    %998 = vmatprep.subr.bf16.mxu0 0
    %999 = vmatpush1.bf16.msra.mxu0 %v988
    %1000 = vmatprep.subr.bf16.mxu0 0
    %1001 = vmatpush1.bf16.msra.mxu0 %v989
    %1002 = vmatprep.subr.bf16.mxu0 0
    %1003 = vmatpush1.bf16.msra.mxu0 0
    %1004 = vmatprep.subr.bf16.mxu0 0
    %1005 = vmatpush1.bf16.msra.mxu0 0
    %1006 = vmatprep.subr.bf16.mxu0 0
    %1007 = vmatpush1.bf16.msra.mxu0 0
    %1008 = vmatprep.subr.bf16.mxu0 0
    %1009 = vmatpush1.bf16.msra.mxu0 0
    %1010 = vmatprep.subr.bf16.mxu0 0
    %1011 = vmatpush1.bf16.msra.mxu0 0
    %1012 = vmatprep.subr.bf16.mxu0 0
    %1013 = vmatpush1.bf16.msra.mxu0 0
    %1014 = vmatprep.subr.bf16.mxu0 0
    %1015 = vmatpush1.bf16.msra.mxu0 0
    %1016 = vmatprep.subr.bf16.mxu0 0
    %1017 = vmatpush1.bf16.msra.mxu0 0
    %1018 = vmatprep.subr.bf16.mxu0 0
    %1019 = vmatpush1.bf16.msra.mxu0 0
    %1020 = vmatprep.subr.bf16.mxu0 0
    %1021 = vmatpush1.bf16.msra.mxu0 0
    %1022 = vmatprep.subr.bf16.mxu0 0
    %1023 = vmatpush1.bf16.msra.mxu0 0
    %1024 = vmatprep.subr.bf16.mxu0 0
    %1025 = vmatpush1.bf16.msra.mxu0 0
    %1026 = vmatprep.subr.bf16.mxu0 0
    %1027 = vmatpush1.bf16.msra.mxu0 0
    %1028 = vmatprep.subr.bf16.mxu0 0
    %1029 = vmatpush1.bf16.msra.mxu0 0
    %1030 = vmatprep.mubr.bf16.mxu0 0
    %1031 = vmatmul.mubr.bf16.gmra.mrb[0].mxu0 %v993
    %v1032 = vpop.f32.mrb[0].mxu0
    %v1033 = vadd.f32 0.0, %v1032
    %v1034 = vpop.f32.mrb[0].mxu0
    %v1035 = vpop.f32.mrb[0].mxu0
    %v1036 = vadd.f32 0.0, %v1035
    %v1037 = vpop.f32.mrb[0].mxu0
    %1038 = vmatprep.mubr.bf16.mxu0 0
    %1039 = vmatmul.mubr.bf16.gmra.mrb[0].mxu0 %v996
    %v1040 = vpop.f32.mrb[0].mxu0
    %v1041 = vadd.f32 0.0, %v1040
    %v1042 = vpop.f32.mrb[0].mxu0
    %v1043 = vpop.f32.mrb[0].mxu0
    %v1044 = vadd.f32 0.0, %v1043
    %v1045 = vpop.f32.mrb[0].mxu0
    %1046 = vdwg.mxu0
    %v1051 = vunpack.c.l.b16 %v958
    %v1052 = vunpack.c.l.b16 %v959
    %v1053 = vunpack.c.l.b16 %v960
    %v1054 = vunpack.c.l.b16 %v961
    %v1055 = vpack.c.b16 %v1052, %v1051
    %v1056 = vpack.c.b16 %v1054, %v1053
    %v1060 = vsel %vm201, %v956, 0
    %v1063 = vsel %vm201, %v957, 0
    %1065 = vmatprep.subr.bf16.mxu0 0
    %1066 = vmatpush1.bf16.msra.mxu0 %v1055
    %1067 = vmatprep.subr.bf16.mxu0 0
    %1068 = vmatpush1.bf16.msra.mxu0 %v1056
    %1069 = vmatprep.subr.bf16.mxu0 0
    %1070 = vmatpush1.bf16.msra.mxu0 0
    %1071 = vmatprep.subr.bf16.mxu0 0
    %1072 = vmatpush1.bf16.msra.mxu0 0
    %1073 = vmatprep.subr.bf16.mxu0 0
    %1074 = vmatpush1.bf16.msra.mxu0 0
    %1075 = vmatprep.subr.bf16.mxu0 0
    %1076 = vmatpush1.bf16.msra.mxu0 0
    %1077 = vmatprep.subr.bf16.mxu0 0
    %1078 = vmatpush1.bf16.msra.mxu0 0
    %1079 = vmatprep.subr.bf16.mxu0 0
    %1080 = vmatpush1.bf16.msra.mxu0 0
    %1081 = vmatprep.subr.bf16.mxu0 0
    %1082 = vmatpush1.bf16.msra.mxu0 0
    %1083 = vmatprep.subr.bf16.mxu0 0
    %1084 = vmatpush1.bf16.msra.mxu0 0
    %1085 = vmatprep.subr.bf16.mxu0 0
    %1086 = vmatpush1.bf16.msra.mxu0 0
    %1087 = vmatprep.subr.bf16.mxu0 0
    %1088 = vmatpush1.bf16.msra.mxu0 0
    %1089 = vmatprep.subr.bf16.mxu0 0
    %1090 = vmatpush1.bf16.msra.mxu0 0
    %1091 = vmatprep.subr.bf16.mxu0 0
    %1092 = vmatpush1.bf16.msra.mxu0 0
    %1093 = vmatprep.subr.bf16.mxu0 0
    %1094 = vmatpush1.bf16.msra.mxu0 0
    %1095 = vmatprep.subr.bf16.mxu0 0
    %1096 = vmatpush1.bf16.msra.mxu0 0
    %1097 = vmatprep.mubr.bf16.mxu0 0
    %1098 = vmatmul.mubr.bf16.gmra.mrb[0].mxu0 %v1060
    %v1099 = vpop.f32.mrb[0].mxu0
    %v1100 = vadd.f32 %v1033, %v1099
    %v1101 = vpop.f32.mrb[0].mxu0
    %v1102 = vpop.f32.mrb[0].mxu0
    %v1103 = vadd.f32 %v1036, %v1102
    %v1104 = vpop.f32.mrb[0].mxu0
    %1105 = vmatprep.mubr.bf16.mxu0 0
    %1106 = vmatmul.mubr.bf16.gmra.mrb[0].mxu0 %v1063
    %v1107 = vpop.f32.mrb[0].mxu0
    %v1108 = vadd.f32 %v1041, %v1107
    %v1109 = vpop.f32.mrb[0].mxu0
    %v1110 = vpop.f32.mrb[0].mxu0
    %v1111 = vadd.f32 %v1044, %v1110
    %v1112 = vpop.f32.mrb[0].mxu0
    %1113 = vdwg.mxu0
    %v1114 = vrot.slane %v952, 1
    %v1115 = vrot.slane %v953, 1
    %v1116 = vrot.slane %v954, 1
    %v1117 = vrot.slane %v955, 1
    %v1118 = vsel %vm328, %v1116, %v1117
    %v1119 = vsel %vm328, %v1115, %v1116
    %v1120 = vsel %vm328, %v1114, %v1115
    %v1121 = vsel %vm328, %v1117, %v1114
    %v1122 = vsel %vm337, %v1120, 0.0
    %v1123 = vsel %vm338, %v1119, 0.0
    %v1124 = vsel %vm339, %v1118, 0.0
    %v1125 = vsel %vm340, %v1121, 0.0
    %v1126 = vpack.c.bf16 %v1123, %v1122
    %v1127 = vpack.c.bf16 %v1125, %v1124
    %v1128 = vld [vmem:[%s1 + $0xb8] sm:$0xf]
    %v1129 = vld [vmem:[%s1 + $0xbc] sm:$0xf]
    %v1130 = vld [vmem:[%s1 + $0xc0] sm:$0xf]
    %v1131 = vld [vmem:[%s1 + $0xc4] sm:$0xf]
    %v1136 = vunpack.c.l.b16 %v1128
    %v1137 = vunpack.c.l.b16 %v1129
    %v1138 = vunpack.c.l.b16 %v1130
    %v1139 = vunpack.c.l.b16 %v1131
    %v1140 = vpack.c.b16 %v1137, %v1136
    %v1141 = vpack.c.b16 %v1139, %v1138
    %v1145 = vsel %vm201, %v1126, 0
    %v1148 = vsel %vm201, %v1127, 0
    %1150 = vmatprep.subr.bf16.mxu0 0
    %1151 = vmatpush1.bf16.msra.mxu0 %v1140
    %1152 = vmatprep.subr.bf16.mxu0 0
    %1153 = vmatpush1.bf16.msra.mxu0 %v1141
    %1154 = vmatprep.subr.bf16.mxu0 0
    %1155 = vmatpush1.bf16.msra.mxu0 0
    %1156 = vmatprep.subr.bf16.mxu0 0
    %1157 = vmatpush1.bf16.msra.mxu0 0
    %1158 = vmatprep.subr.bf16.mxu0 0
    %1159 = vmatpush1.bf16.msra.mxu0 0
    %1160 = vmatprep.subr.bf16.mxu0 0
    %1161 = vmatpush1.bf16.msra.mxu0 0
    %1162 = vmatprep.subr.bf16.mxu0 0
    %1163 = vmatpush1.bf16.msra.mxu0 0
    %1164 = vmatprep.subr.bf16.mxu0 0
    %1165 = vmatpush1.bf16.msra.mxu0 0
    %1166 = vmatprep.subr.bf16.mxu0 0
    %1167 = vmatpush1.bf16.msra.mxu0 0
    %1168 = vmatprep.subr.bf16.mxu0 0
    %1169 = vmatpush1.bf16.msra.mxu0 0
    %1170 = vmatprep.subr.bf16.mxu0 0
    %1171 = vmatpush1.bf16.msra.mxu0 0
    %1172 = vmatprep.subr.bf16.mxu0 0
    %1173 = vmatpush1.bf16.msra.mxu0 0
    %1174 = vmatprep.subr.bf16.mxu0 0
    %1175 = vmatpush1.bf16.msra.mxu0 0
    %1176 = vmatprep.subr.bf16.mxu0 0
    %1177 = vmatpush1.bf16.msra.mxu0 0
    %1178 = vmatprep.subr.bf16.mxu0 0
    %1179 = vmatpush1.bf16.msra.mxu0 0
    %1180 = vmatprep.subr.bf16.mxu0 0
    %1181 = vmatpush1.bf16.msra.mxu0 0
    %1182 = vmatprep.mubr.bf16.mxu0 0
    %1183 = vmatmul.mubr.bf16.gmra.mrb[0].mxu0 %v1145
    %v1184 = vpop.f32.mrb[0].mxu0
    %v1185 = vadd.f32 0.0, %v1184
    %v1186 = vpop.f32.mrb[0].mxu0
    %v1187 = vpop.f32.mrb[0].mxu0
    %v1188 = vadd.f32 0.0, %v1187
    %v1189 = vpop.f32.mrb[0].mxu0
    %1190 = vmatprep.mubr.bf16.mxu0 0
    %1191 = vmatmul.mubr.bf16.gmra.mrb[0].mxu0 %v1148
    %v1192 = vpop.f32.mrb[0].mxu0
    %v1193 = vadd.f32 0.0, %v1192
    %v1194 = vpop.f32.mrb[0].mxu0
    %v1195 = vpop.f32.mrb[0].mxu0
    %v1196 = vadd.f32 0.0, %v1195
    %v1197 = vpop.f32.mrb[0].mxu0
    %1198 = vdwg.mxu0
    %v1199 = vadd.f32 %v1100, %v1185
    %v1200 = vadd.f32 %v1103, %v1188
    %v1201 = vadd.f32 %v1108, %v1193
    %v1202 = vadd.f32 %v1111, %v1196
    %v1203 = vlaneseq
    %v1204 = vshrl.u32 %v1203, 7
    %v1205 = vsub.s32 4, %v1204
    %v1206 = vrot.slane %v16, %v1205
    %v1207 = vadd.f32 %v1199, %v1206
    %v1208 = vadd.f32 %v1200, %v1206
    %v1209 = vadd.f32 %v1201, %v1206
    %v1210 = vadd.f32 %v1202, %v1206
    %v1211 = vadd.f32 %v1207, %v693
    %v1212 = vadd.f32 %v1208, %v694
    %v1213 = vadd.f32 %v1209, %v695
    %v1214 = vadd.f32 %v1210, %v696
    %v1215 = vmax.f32 %v1211, 0.0
    %v1216 = vmax.f32 %v1212, 0.0
    %v1217 = vmax.f32 %v1213, 0.0
    %v1218 = vmax.f32 %v1214, 0.0
    %v1219 = vpack.c.bf16 %v1216, %v1215
    %v1220 = vpack.c.bf16 %v1218, %v1217
    %v1221 = vld [vmem:[%s1 + $0xd8] sm:$0xf]
    %v1222 = vld [vmem:[%s1 + $0xdc] sm:$0xf]
    %v1223 = vld [vmem:[%s1 + $0xe0] sm:$0xf]
    %v1224 = vld [vmem:[%s1 + $0xe4] sm:$0xf]
    %v1225 = vrot.slane %v1215, 7
    %v1226 = vrot.slane %v1216, 7
    %v1227 = vrot.slane %v1217, 7
    %v1228 = vrot.slane %v1218, 7
    %v1229 = vsel %vm166, %v1227, %v1228
    %v1230 = vsel %vm166, %v1226, %v1227
    %v1231 = vsel %vm166, %v1225, %v1226
    %v1232 = vsel %vm166, %v1228, %v1225
    %v1233 = vsel %vm175, %v1232, 0.0
    %v1234 = vsel %vm176, %v1231, 0.0
    %v1235 = vsel %vm177, %v1230, 0.0
    %v1236 = vsel %vm178, %v1229, 0.0
    %v1237 = vpack.c.bf16 %v1234, %v1233
    %v1238 = vpack.c.bf16 %v1236, %v1235
    %v1239 = vld [vmem:[%s1 + $0xc8] sm:$0xf]
    %v1240 = vld [vmem:[%s1 + $0xcc] sm:$0xf]
    %v1241 = vld [vmem:[%s1 + $0xd0] sm:$0xf]
    %v1242 = vld [vmem:[%s1 + $0xd4] sm:$0xf]
    %v1247 = vunpack.c.l.b16 %v1239
    %v1248 = vunpack.c.l.b16 %v1240
    %v1249 = vunpack.c.l.b16 %v1241
    %v1250 = vunpack.c.l.b16 %v1242
    %v1251 = vpack.c.b16 %v1248, %v1247
    %v1252 = vpack.c.b16 %v1250, %v1249
    %v1256 = vsel %vm201, %v1237, 0
    %v1259 = vsel %vm201, %v1238, 0
    %1261 = vmatprep.subr.bf16.mxu0 0
    %1262 = vmatpush1.bf16.msra.mxu0 %v1251
    %1263 = vmatprep.subr.bf16.mxu0 0
    %1264 = vmatpush1.bf16.msra.mxu0 %v1252
    %1265 = vmatprep.subr.bf16.mxu0 0
    %1266 = vmatpush1.bf16.msra.mxu0 0
    %1267 = vmatprep.subr.bf16.mxu0 0
    %1268 = vmatpush1.bf16.msra.mxu0 0
    %1269 = vmatprep.subr.bf16.mxu0 0
    %1270 = vmatpush1.bf16.msra.mxu0 0
    %1271 = vmatprep.subr.bf16.mxu0 0
    %1272 = vmatpush1.bf16.msra.mxu0 0
    %1273 = vmatprep.subr.bf16.mxu0 0
    %1274 = vmatpush1.bf16.msra.mxu0 0
    %1275 = vmatprep.subr.bf16.mxu0 0
    %1276 = vmatpush1.bf16.msra.mxu0 0
    %1277 = vmatprep.subr.bf16.mxu0 0
    %1278 = vmatpush1.bf16.msra.mxu0 0
    %1279 = vmatprep.subr.bf16.mxu0 0
    %1280 = vmatpush1.bf16.msra.mxu0 0
    %1281 = vmatprep.subr.bf16.mxu0 0
    %1282 = vmatpush1.bf16.msra.mxu0 0
    %1283 = vmatprep.subr.bf16.mxu0 0
    %1284 = vmatpush1.bf16.msra.mxu0 0
    %1285 = vmatprep.subr.bf16.mxu0 0
    %1286 = vmatpush1.bf16.msra.mxu0 0
    %1287 = vmatprep.subr.bf16.mxu0 0
    %1288 = vmatpush1.bf16.msra.mxu0 0
    %1289 = vmatprep.subr.bf16.mxu0 0
    %1290 = vmatpush1.bf16.msra.mxu0 0
    %1291 = vmatprep.subr.bf16.mxu0 0
    %1292 = vmatpush1.bf16.msra.mxu0 0
    %1293 = vmatprep.mubr.bf16.mxu0 0
    %1294 = vmatmul.mubr.bf16.gmra.mrb[0].mxu0 %v1256
    %v1295 = vpop.f32.mrb[0].mxu0
    %v1296 = vadd.f32 0.0, %v1295
    %v1297 = vpop.f32.mrb[0].mxu0
    %v1298 = vpop.f32.mrb[0].mxu0
    %v1299 = vadd.f32 0.0, %v1298
    %v1300 = vpop.f32.mrb[0].mxu0
    %1301 = vmatprep.mubr.bf16.mxu0 0
    %1302 = vmatmul.mubr.bf16.gmra.mrb[0].mxu0 %v1259
    %v1303 = vpop.f32.mrb[0].mxu0
    %v1304 = vadd.f32 0.0, %v1303
    %v1305 = vpop.f32.mrb[0].mxu0
    %v1306 = vpop.f32.mrb[0].mxu0
    %v1307 = vadd.f32 0.0, %v1306
    %v1308 = vpop.f32.mrb[0].mxu0
    %1309 = vdwg.mxu0
    %v1314 = vunpack.c.l.b16 %v1221
    %v1315 = vunpack.c.l.b16 %v1222
    %v1316 = vunpack.c.l.b16 %v1223
    %v1317 = vunpack.c.l.b16 %v1224
    %v1318 = vpack.c.b16 %v1315, %v1314
    %v1319 = vpack.c.b16 %v1317, %v1316
    %v1323 = vsel %vm201, %v1219, 0
    %v1326 = vsel %vm201, %v1220, 0
    %1328 = vmatprep.subr.bf16.mxu0 0
    %1329 = vmatpush1.bf16.msra.mxu0 %v1318
    %1330 = vmatprep.subr.bf16.mxu0 0
    %1331 = vmatpush1.bf16.msra.mxu0 %v1319
    %1332 = vmatprep.subr.bf16.mxu0 0
    %1333 = vmatpush1.bf16.msra.mxu0 0
    %1334 = vmatprep.subr.bf16.mxu0 0
    %1335 = vmatpush1.bf16.msra.mxu0 0
    %1336 = vmatprep.subr.bf16.mxu0 0
    %1337 = vmatpush1.bf16.msra.mxu0 0
    %1338 = vmatprep.subr.bf16.mxu0 0
    %1339 = vmatpush1.bf16.msra.mxu0 0
    %1340 = vmatprep.subr.bf16.mxu0 0
    %1341 = vmatpush1.bf16.msra.mxu0 0
    %1342 = vmatprep.subr.bf16.mxu0 0
    %1343 = vmatpush1.bf16.msra.mxu0 0
    %1344 = vmatprep.subr.bf16.mxu0 0
    %1345 = vmatpush1.bf16.msra.mxu0 0
    %1346 = vmatprep.subr.bf16.mxu0 0
    %1347 = vmatpush1.bf16.msra.mxu0 0
    %1348 = vmatprep.subr.bf16.mxu0 0
    %1349 = vmatpush1.bf16.msra.mxu0 0
    %1350 = vmatprep.subr.bf16.mxu0 0
    %1351 = vmatpush1.bf16.msra.mxu0 0
    %1352 = vmatprep.subr.bf16.mxu0 0
    %1353 = vmatpush1.bf16.msra.mxu0 0
    %1354 = vmatprep.subr.bf16.mxu0 0
    %1355 = vmatpush1.bf16.msra.mxu0 0
    %1356 = vmatprep.subr.bf16.mxu0 0
    %1357 = vmatpush1.bf16.msra.mxu0 0
    %1358 = vmatprep.subr.bf16.mxu0 0
    %1359 = vmatpush1.bf16.msra.mxu0 0
    %1360 = vmatprep.mubr.bf16.mxu0 0
    %1361 = vmatmul.mubr.bf16.gmra.mrb[0].mxu0 %v1323
    %v1362 = vpop.f32.mrb[0].mxu0
    %v1363 = vadd.f32 %v1296, %v1362
    %v1364 = vpop.f32.mrb[0].mxu0
    %v1365 = vpop.f32.mrb[0].mxu0
    %v1366 = vadd.f32 %v1299, %v1365
    %v1367 = vpop.f32.mrb[0].mxu0
    %1368 = vmatprep.mubr.bf16.mxu0 0
    %1369 = vmatmul.mubr.bf16.gmra.mrb[0].mxu0 %v1326
    %v1370 = vpop.f32.mrb[0].mxu0
    %v1371 = vadd.f32 %v1304, %v1370
    %v1372 = vpop.f32.mrb[0].mxu0
    %v1373 = vpop.f32.mrb[0].mxu0
    %v1374 = vadd.f32 %v1307, %v1373
    %v1375 = vpop.f32.mrb[0].mxu0
    %1376 = vdwg.mxu0
    %v1377 = vrot.slane %v1215, 1
    %v1378 = vrot.slane %v1216, 1
    %v1379 = vrot.slane %v1217, 1
    %v1380 = vrot.slane %v1218, 1
    %v1381 = vsel %vm328, %v1379, %v1380
    %v1382 = vsel %vm328, %v1378, %v1379
    %v1383 = vsel %vm328, %v1377, %v1378
    %v1384 = vsel %vm328, %v1380, %v1377
    %v1385 = vsel %vm337, %v1383, 0.0
    %v1386 = vsel %vm338, %v1382, 0.0
    %v1387 = vsel %vm339, %v1381, 0.0
    %v1388 = vsel %vm340, %v1384, 0.0
    %v1389 = vpack.c.bf16 %v1386, %v1385
    %v1390 = vpack.c.bf16 %v1388, %v1387
    %v1391 = vld [vmem:[%s1 + $0xe8] sm:$0xf]
    %v1392 = vld [vmem:[%s1 + $0xec] sm:$0xf]
    %v1393 = vld [vmem:[%s1 + $0xf0] sm:$0xf]
    %v1394 = vld [vmem:[%s1 + $0xf4] sm:$0xf]
    %v1399 = vunpack.c.l.b16 %v1391
    %v1400 = vunpack.c.l.b16 %v1392
    %v1401 = vunpack.c.l.b16 %v1393
    %v1402 = vunpack.c.l.b16 %v1394
    %v1403 = vpack.c.b16 %v1400, %v1399
    %v1404 = vpack.c.b16 %v1402, %v1401
    %v1408 = vsel %vm201, %v1389, 0
    %v1411 = vsel %vm201, %v1390, 0
    %1413 = vmatprep.subr.bf16.mxu0 0
    %1414 = vmatpush1.bf16.msra.mxu0 %v1403
    %1415 = vmatprep.subr.bf16.mxu0 0
    %1416 = vmatpush1.bf16.msra.mxu0 %v1404
    %1417 = vmatprep.subr.bf16.mxu0 0
    %1418 = vmatpush1.bf16.msra.mxu0 0
    %1419 = vmatprep.subr.bf16.mxu0 0
    %1420 = vmatpush1.bf16.msra.mxu0 0
    %1421 = vmatprep.subr.bf16.mxu0 0
    %1422 = vmatpush1.bf16.msra.mxu0 0
    %1423 = vmatprep.subr.bf16.mxu0 0
    %1424 = vmatpush1.bf16.msra.mxu0 0
    %1425 = vmatprep.subr.bf16.mxu0 0
    %1426 = vmatpush1.bf16.msra.mxu0 0
    %1427 = vmatprep.subr.bf16.mxu0 0
    %1428 = vmatpush1.bf16.msra.mxu0 0
    %1429 = vmatprep.subr.bf16.mxu0 0
    %1430 = vmatpush1.bf16.msra.mxu0 0
    %1431 = vmatprep.subr.bf16.mxu0 0
    %1432 = vmatpush1.bf16.msra.mxu0 0
    %1433 = vmatprep.subr.bf16.mxu0 0
    %1434 = vmatpush1.bf16.msra.mxu0 0
    %1435 = vmatprep.subr.bf16.mxu0 0
    %1436 = vmatpush1.bf16.msra.mxu0 0
    %1437 = vmatprep.subr.bf16.mxu0 0
    %1438 = vmatpush1.bf16.msra.mxu0 0
    %1439 = vmatprep.subr.bf16.mxu0 0
    %1440 = vmatpush1.bf16.msra.mxu0 0
    %1441 = vmatprep.subr.bf16.mxu0 0
    %1442 = vmatpush1.bf16.msra.mxu0 0
    %1443 = vmatprep.subr.bf16.mxu0 0
    %1444 = vmatpush1.bf16.msra.mxu0 0
    %1445 = vmatprep.mubr.bf16.mxu0 0
    %1446 = vmatmul.mubr.bf16.gmra.mrb[0].mxu0 %v1408
    %v1447 = vpop.f32.mrb[0].mxu0
    %v1448 = vadd.f32 0.0, %v1447
    %v1449 = vpop.f32.mrb[0].mxu0
    %v1450 = vpop.f32.mrb[0].mxu0
    %v1451 = vadd.f32 0.0, %v1450
    %v1452 = vpop.f32.mrb[0].mxu0
    %1453 = vmatprep.mubr.bf16.mxu0 0
    %1454 = vmatmul.mubr.bf16.gmra.mrb[0].mxu0 %v1411
    %v1455 = vpop.f32.mrb[0].mxu0
    %v1456 = vadd.f32 0.0, %v1455
    %v1457 = vpop.f32.mrb[0].mxu0
    %v1458 = vpop.f32.mrb[0].mxu0
    %v1459 = vadd.f32 0.0, %v1458
    %v1460 = vpop.f32.mrb[0].mxu0
    %1461 = vdwg.mxu0
    %v1462 = vadd.f32 %v1363, %v1448
    %v1463 = vadd.f32 %v1366, %v1451
    %v1464 = vadd.f32 %v1371, %v1456
    %v1465 = vadd.f32 %v1374, %v1459
    %v1466 = vlaneseq
    %v1467 = vshrl.u32 %v1466, 7
    %v1468 = vsub.s32 5, %v1467
    %v1469 = vrot.slane %v16, %v1468
    %v1470 = vadd.f32 %v1462, %v1469
    %v1471 = vadd.f32 %v1463, %v1469
    %v1472 = vadd.f32 %v1464, %v1469
    %v1473 = vadd.f32 %v1465, %v1469
    %v1474 = vmax.f32 %v1470, 0.0
    %v1475 = vmax.f32 %v1471, 0.0
    %v1476 = vmax.f32 %v1472, 0.0
    %v1477 = vmax.f32 %v1473, 0.0
    %v1478 = vpack.c.bf16 %v1475, %v1474
    %v1479 = vpack.c.bf16 %v1477, %v1476
    %v1480 = vld [vmem:[%s1 + $0x108] sm:$0xf]
    %v1481 = vld [vmem:[%s1 + $0x10c] sm:$0xf]
    %v1482 = vld [vmem:[%s1 + $0x110] sm:$0xf]
    %v1483 = vld [vmem:[%s1 + $0x114] sm:$0xf]
    %v1484 = vrot.slane %v1474, 7
    %v1485 = vrot.slane %v1475, 7
    %v1486 = vrot.slane %v1476, 7
    %v1487 = vrot.slane %v1477, 7
    %v1488 = vsel %vm166, %v1486, %v1487
    %v1489 = vsel %vm166, %v1485, %v1486
    %v1490 = vsel %vm166, %v1484, %v1485
    %v1491 = vsel %vm166, %v1487, %v1484
    %v1492 = vsel %vm175, %v1491, 0.0
    %v1493 = vsel %vm176, %v1490, 0.0
    %v1494 = vsel %vm177, %v1489, 0.0
    %v1495 = vsel %vm178, %v1488, 0.0
    %v1496 = vpack.c.bf16 %v1493, %v1492
    %v1497 = vpack.c.bf16 %v1495, %v1494
    %v1498 = vld [vmem:[%s1 + $0xf8] sm:$0xf]
    %v1499 = vld [vmem:[%s1 + $0xfc] sm:$0xf]
    %v1500 = vld [vmem:[%s1 + $0x100] sm:$0xf]
    %v1501 = vld [vmem:[%s1 + $0x104] sm:$0xf]
    %v1506 = vunpack.c.l.b16 %v1498
    %v1507 = vunpack.c.l.b16 %v1499
    %v1508 = vunpack.c.l.b16 %v1500
    %v1509 = vunpack.c.l.b16 %v1501
    %v1510 = vpack.c.b16 %v1507, %v1506
    %v1511 = vpack.c.b16 %v1509, %v1508
    %v1515 = vsel %vm201, %v1496, 0
    %v1518 = vsel %vm201, %v1497, 0
    %1520 = vmatprep.subr.bf16.mxu0 0
    %1521 = vmatpush1.bf16.msra.mxu0 %v1510
    %1522 = vmatprep.subr.bf16.mxu0 0
    %1523 = vmatpush1.bf16.msra.mxu0 %v1511
    %1524 = vmatprep.subr.bf16.mxu0 0
    %1525 = vmatpush1.bf16.msra.mxu0 0
    %1526 = vmatprep.subr.bf16.mxu0 0
    %1527 = vmatpush1.bf16.msra.mxu0 0
    %1528 = vmatprep.subr.bf16.mxu0 0
    %1529 = vmatpush1.bf16.msra.mxu0 0
    %1530 = vmatprep.subr.bf16.mxu0 0
    %1531 = vmatpush1.bf16.msra.mxu0 0
    %1532 = vmatprep.subr.bf16.mxu0 0
    %1533 = vmatpush1.bf16.msra.mxu0 0
    %1534 = vmatprep.subr.bf16.mxu0 0
    %1535 = vmatpush1.bf16.msra.mxu0 0
    %1536 = vmatprep.subr.bf16.mxu0 0
    %1537 = vmatpush1.bf16.msra.mxu0 0
    %1538 = vmatprep.subr.bf16.mxu0 0
    %1539 = vmatpush1.bf16.msra.mxu0 0
    %1540 = vmatprep.subr.bf16.mxu0 0
    %1541 = vmatpush1.bf16.msra.mxu0 0
    %1542 = vmatprep.subr.bf16.mxu0 0
    %1543 = vmatpush1.bf16.msra.mxu0 0
    %1544 = vmatprep.subr.bf16.mxu0 0
    %1545 = vmatpush1.bf16.msra.mxu0 0
    %1546 = vmatprep.subr.bf16.mxu0 0
    %1547 = vmatpush1.bf16.msra.mxu0 0
    %1548 = vmatprep.subr.bf16.mxu0 0
    %1549 = vmatpush1.bf16.msra.mxu0 0
    %1550 = vmatprep.subr.bf16.mxu0 0
    %1551 = vmatpush1.bf16.msra.mxu0 0
    %1552 = vmatprep.mubr.bf16.mxu0 0
    %1553 = vmatmul.mubr.bf16.gmra.mrb[0].mxu0 %v1515
    %v1554 = vpop.f32.mrb[0].mxu0
    %v1555 = vadd.f32 0.0, %v1554
    %v1556 = vpop.f32.mrb[0].mxu0
    %v1557 = vpop.f32.mrb[0].mxu0
    %v1558 = vadd.f32 0.0, %v1557
    %v1559 = vpop.f32.mrb[0].mxu0
    %1560 = vmatprep.mubr.bf16.mxu0 0
    %1561 = vmatmul.mubr.bf16.gmra.mrb[0].mxu0 %v1518
    %v1562 = vpop.f32.mrb[0].mxu0
    %v1563 = vadd.f32 0.0, %v1562
    %v1564 = vpop.f32.mrb[0].mxu0
    %v1565 = vpop.f32.mrb[0].mxu0
    %v1566 = vadd.f32 0.0, %v1565
    %v1567 = vpop.f32.mrb[0].mxu0
    %1568 = vdwg.mxu0
    %v1573 = vunpack.c.l.b16 %v1480
    %v1574 = vunpack.c.l.b16 %v1481
    %v1575 = vunpack.c.l.b16 %v1482
    %v1576 = vunpack.c.l.b16 %v1483
    %v1577 = vpack.c.b16 %v1574, %v1573
    %v1578 = vpack.c.b16 %v1576, %v1575
    %v1582 = vsel %vm201, %v1478, 0
    %v1585 = vsel %vm201, %v1479, 0
    %1587 = vmatprep.subr.bf16.mxu0 0
    %1588 = vmatpush1.bf16.msra.mxu0 %v1577
    %1589 = vmatprep.subr.bf16.mxu0 0
    %1590 = vmatpush1.bf16.msra.mxu0 %v1578
    %1591 = vmatprep.subr.bf16.mxu0 0
    %1592 = vmatpush1.bf16.msra.mxu0 0
    %1593 = vmatprep.subr.bf16.mxu0 0
    %1594 = vmatpush1.bf16.msra.mxu0 0
    %1595 = vmatprep.subr.bf16.mxu0 0
    %1596 = vmatpush1.bf16.msra.mxu0 0
    %1597 = vmatprep.subr.bf16.mxu0 0
    %1598 = vmatpush1.bf16.msra.mxu0 0
    %1599 = vmatprep.subr.bf16.mxu0 0
    %1600 = vmatpush1.bf16.msra.mxu0 0
    %1601 = vmatprep.subr.bf16.mxu0 0
    %1602 = vmatpush1.bf16.msra.mxu0 0
    %1603 = vmatprep.subr.bf16.mxu0 0
    %1604 = vmatpush1.bf16.msra.mxu0 0
    %1605 = vmatprep.subr.bf16.mxu0 0
    %1606 = vmatpush1.bf16.msra.mxu0 0
    %1607 = vmatprep.subr.bf16.mxu0 0
    %1608 = vmatpush1.bf16.msra.mxu0 0
    %1609 = vmatprep.subr.bf16.mxu0 0
    %1610 = vmatpush1.bf16.msra.mxu0 0
    %1611 = vmatprep.subr.bf16.mxu0 0
    %1612 = vmatpush1.bf16.msra.mxu0 0
    %1613 = vmatprep.subr.bf16.mxu0 0
    %1614 = vmatpush1.bf16.msra.mxu0 0
    %1615 = vmatprep.subr.bf16.mxu0 0
    %1616 = vmatpush1.bf16.msra.mxu0 0
    %1617 = vmatprep.subr.bf16.mxu0 0
    %1618 = vmatpush1.bf16.msra.mxu0 0
    %1619 = vmatprep.mubr.bf16.mxu0 0
    %1620 = vmatmul.mubr.bf16.gmra.mrb[0].mxu0 %v1582
    %v1621 = vpop.f32.mrb[0].mxu0
    %v1622 = vadd.f32 %v1555, %v1621
    %v1623 = vpop.f32.mrb[0].mxu0
    %v1624 = vpop.f32.mrb[0].mxu0
    %v1625 = vadd.f32 %v1558, %v1624
    %v1626 = vpop.f32.mrb[0].mxu0
    %1627 = vmatprep.mubr.bf16.mxu0 0
    %1628 = vmatmul.mubr.bf16.gmra.mrb[0].mxu0 %v1585
    %v1629 = vpop.f32.mrb[0].mxu0
    %v1630 = vadd.f32 %v1563, %v1629
    %v1631 = vpop.f32.mrb[0].mxu0
    %v1632 = vpop.f32.mrb[0].mxu0
    %v1633 = vadd.f32 %v1566, %v1632
    %v1634 = vpop.f32.mrb[0].mxu0
    %1635 = vdwg.mxu0
    %v1636 = vrot.slane %v1474, 1
    %v1637 = vrot.slane %v1475, 1
    %v1638 = vrot.slane %v1476, 1
    %v1639 = vrot.slane %v1477, 1
    %v1640 = vsel %vm328, %v1638, %v1639
    %v1641 = vsel %vm328, %v1637, %v1638
    %v1642 = vsel %vm328, %v1636, %v1637
    %v1643 = vsel %vm328, %v1639, %v1636
    %v1644 = vsel %vm337, %v1642, 0.0
    %v1645 = vsel %vm338, %v1641, 0.0
    %v1646 = vsel %vm339, %v1640, 0.0
    %v1647 = vsel %vm340, %v1643, 0.0
    %v1648 = vpack.c.bf16 %v1645, %v1644
    %v1649 = vpack.c.bf16 %v1647, %v1646
    %v1650 = vld [vmem:[%s1 + $0x118] sm:$0xf]
    %v1651 = vld [vmem:[%s1 + $0x11c] sm:$0xf]
    %v1652 = vld [vmem:[%s1 + $0x120] sm:$0xf]
    %v1653 = vld [vmem:[%s1 + $0x124] sm:$0xf]
    %v1658 = vunpack.c.l.b16 %v1650
    %v1659 = vunpack.c.l.b16 %v1651
    %v1660 = vunpack.c.l.b16 %v1652
    %v1661 = vunpack.c.l.b16 %v1653
    %v1662 = vpack.c.b16 %v1659, %v1658
    %v1663 = vpack.c.b16 %v1661, %v1660
    %v1667 = vsel %vm201, %v1648, 0
    %v1670 = vsel %vm201, %v1649, 0
    %1672 = vmatprep.subr.bf16.mxu0 0
    %1673 = vmatpush1.bf16.msra.mxu0 %v1662
    %1674 = vmatprep.subr.bf16.mxu0 0
    %1675 = vmatpush1.bf16.msra.mxu0 %v1663
    %1676 = vmatprep.subr.bf16.mxu0 0
    %1677 = vmatpush1.bf16.msra.mxu0 0
    %1678 = vmatprep.subr.bf16.mxu0 0
    %1679 = vmatpush1.bf16.msra.mxu0 0
    %1680 = vmatprep.subr.bf16.mxu0 0
    %1681 = vmatpush1.bf16.msra.mxu0 0
    %1682 = vmatprep.subr.bf16.mxu0 0
    %1683 = vmatpush1.bf16.msra.mxu0 0
    %1684 = vmatprep.subr.bf16.mxu0 0
    %1685 = vmatpush1.bf16.msra.mxu0 0
    %1686 = vmatprep.subr.bf16.mxu0 0
    %1687 = vmatpush1.bf16.msra.mxu0 0
    %1688 = vmatprep.subr.bf16.mxu0 0
    %1689 = vmatpush1.bf16.msra.mxu0 0
    %1690 = vmatprep.subr.bf16.mxu0 0
    %1691 = vmatpush1.bf16.msra.mxu0 0
    %1692 = vmatprep.subr.bf16.mxu0 0
    %1693 = vmatpush1.bf16.msra.mxu0 0
    %1694 = vmatprep.subr.bf16.mxu0 0
    %1695 = vmatpush1.bf16.msra.mxu0 0
    %1696 = vmatprep.subr.bf16.mxu0 0
    %1697 = vmatpush1.bf16.msra.mxu0 0
    %1698 = vmatprep.subr.bf16.mxu0 0
    %1699 = vmatpush1.bf16.msra.mxu0 0
    %1700 = vmatprep.subr.bf16.mxu0 0
    %1701 = vmatpush1.bf16.msra.mxu0 0
    %1702 = vmatprep.subr.bf16.mxu0 0
    %1703 = vmatpush1.bf16.msra.mxu0 0
    %1704 = vmatprep.mubr.bf16.mxu0 0
    %1705 = vmatmul.mubr.bf16.gmra.mrb[0].mxu0 %v1667
    %v1706 = vpop.f32.mrb[0].mxu0
    %v1707 = vadd.f32 0.0, %v1706
    %v1708 = vpop.f32.mrb[0].mxu0
    %v1709 = vpop.f32.mrb[0].mxu0
    %v1710 = vadd.f32 0.0, %v1709
    %v1711 = vpop.f32.mrb[0].mxu0
    %1712 = vmatprep.mubr.bf16.mxu0 0
    %1713 = vmatmul.mubr.bf16.gmra.mrb[0].mxu0 %v1670
    %v1714 = vpop.f32.mrb[0].mxu0
    %v1715 = vadd.f32 0.0, %v1714
    %v1716 = vpop.f32.mrb[0].mxu0
    %v1717 = vpop.f32.mrb[0].mxu0
    %v1718 = vadd.f32 0.0, %v1717
    %v1719 = vpop.f32.mrb[0].mxu0
    %1720 = vdwg.mxu0
    %v1721 = vadd.f32 %v1622, %v1707
    %v1722 = vadd.f32 %v1625, %v1710
    %v1723 = vadd.f32 %v1630, %v1715
    %v1724 = vadd.f32 %v1633, %v1718
    %v1725 = vlaneseq
    %v1726 = vshrl.u32 %v1725, 7
    %v1727 = vsub.s32 6, %v1726
    %v1728 = vrot.slane %v16, %v1727
    %v1729 = vadd.f32 %v1721, %v1728
    %v1730 = vadd.f32 %v1722, %v1728
    %v1731 = vadd.f32 %v1723, %v1728
    %v1732 = vadd.f32 %v1724, %v1728
    %v1733 = vadd.f32 %v1729, %v1215
    %v1734 = vadd.f32 %v1730, %v1216
    %v1735 = vadd.f32 %v1731, %v1217
    %v1736 = vadd.f32 %v1732, %v1218
    %v1737 = vmax.f32 %v1733, 0.0
    %v1738 = vmax.f32 %v1734, 0.0
    %v1739 = vmax.f32 %v1735, 0.0
    %v1740 = vmax.f32 %v1736, 0.0
    %v1741 = vld [vmem:[%s1 + $0x138] sm:$0x1]
    %v1742 = vpack.c.bf16 %v1738, %v1737
    %v1743 = vpack.c.bf16 %v1740, %v1739
    %v1745 = vsel %vm201, %v1741, 0
    %1747 = vmatprep.subr.bf16.mxu0 0
    %1748 = vmatpush1.bf16.msra.mxu0 %v1742
    %1749 = vmatprep.subr.bf16.mxu0 0
    %1750 = vmatpush1.bf16.msra.mxu0 %v1743
    %1751 = vmatprep.subr.bf16.mxu0 0
    %1752 = vmatpush1.bf16.msra.mxu0 0
    %1753 = vmatprep.subr.bf16.mxu0 0
    %1754 = vmatpush1.bf16.msra.mxu0 0
    %1755 = vmatprep.subr.bf16.mxu0 0
    %1756 = vmatpush1.bf16.msra.mxu0 0
    %1757 = vmatprep.subr.bf16.mxu0 0
    %1758 = vmatpush1.bf16.msra.mxu0 0
    %1759 = vmatprep.subr.bf16.mxu0 0
    %1760 = vmatpush1.bf16.msra.mxu0 0
    %1761 = vmatprep.subr.bf16.mxu0 0
    %1762 = vmatpush1.bf16.msra.mxu0 0
    %1763 = vmatprep.subr.bf16.mxu0 0
    %1764 = vmatpush1.bf16.msra.mxu0 0
    %1765 = vmatprep.subr.bf16.mxu0 0
    %1766 = vmatpush1.bf16.msra.mxu0 0
    %1767 = vmatprep.subr.bf16.mxu0 0
    %1768 = vmatpush1.bf16.msra.mxu0 0
    %1769 = vmatprep.subr.bf16.mxu0 0
    %1770 = vmatpush1.bf16.msra.mxu0 0
    %1771 = vmatprep.subr.bf16.mxu0 0
    %1772 = vmatpush1.bf16.msra.mxu0 0
    %1773 = vmatprep.subr.bf16.mxu0 0
    %1774 = vmatpush1.bf16.msra.mxu0 0
    %1775 = vmatprep.subr.bf16.mxu0 0
    %1776 = vmatpush1.bf16.msra.mxu0 0
    %1777 = vmatprep.subr.bf16.mxu0 0
    %1778 = vmatpush1.bf16.msra.mxu0 0
    %1779 = vmatprep.mubr.bf16.mxu0 0
    %1780 = vmatmul.mubr.bf16.gmra.mrb[0].mxu0 %v1745
    %v1781 = vpop.f32.mrb[0].mxu0
    %v1782 = vadd.f32 0.0, %v1781
    %v1783 = vpop.f32.mrb[0].mxu0
    %v1784 = vpop.f32.mrb[0].mxu0
    %v1785 = vpop.f32.mrb[0].mxu0
    %1786 = vdwg.mxu0
    %v1787 = vpack.c.bf16 %v1782, %v1782
    %v1788 = vld [vmem:[%s1 + $0x128] sm:$0xf]
    %v1789 = vld [vmem:[%s1 + $0x12c] sm:$0xf]
    %v1790 = vld [vmem:[%s1 + $0x130] sm:$0xf]
    %v1791 = vld [vmem:[%s1 + $0x134] sm:$0xf]
    %v1792 = vlaneseq
    %v1793 = vshrl.u32 %v1792, 7
    %v1794 = vsub.s32 7, %v1793
    %v1795 = vrot.slane %v16, %v1794
    %v1800 = vunpack.c.l.b16 %v1788
    %v1801 = vunpack.c.l.b16 %v1789
    %v1802 = vunpack.c.l.b16 %v1790
    %v1803 = vunpack.c.l.b16 %v1791
    %v1804 = vpack.c.b16 %v1801, %v1800
    %v1805 = vpack.c.b16 %v1803, %v1802
    %v1809 = vsel %vm201, %v1787, 0
    %1811 = vmatprep.subr.bf16.mxu0 0
    %1812 = vmatpush1.bf16.msra.mxu0 %v1804
    %1813 = vmatprep.subr.bf16.mxu0 0
    %1814 = vmatpush1.bf16.msra.mxu0 %v1805
    %1815 = vmatprep.subr.bf16.mxu0 0
    %1816 = vmatpush1.bf16.msra.mxu0 0
    %1817 = vmatprep.subr.bf16.mxu0 0
    %1818 = vmatpush1.bf16.msra.mxu0 0
    %1819 = vmatprep.subr.bf16.mxu0 0
    %1820 = vmatpush1.bf16.msra.mxu0 0
    %1821 = vmatprep.subr.bf16.mxu0 0
    %1822 = vmatpush1.bf16.msra.mxu0 0
    %1823 = vmatprep.subr.bf16.mxu0 0
    %1824 = vmatpush1.bf16.msra.mxu0 0
    %1825 = vmatprep.subr.bf16.mxu0 0
    %1826 = vmatpush1.bf16.msra.mxu0 0
    %1827 = vmatprep.subr.bf16.mxu0 0
    %1828 = vmatpush1.bf16.msra.mxu0 0
    %1829 = vmatprep.subr.bf16.mxu0 0
    %1830 = vmatpush1.bf16.msra.mxu0 0
    %1831 = vmatprep.subr.bf16.mxu0 0
    %1832 = vmatpush1.bf16.msra.mxu0 0
    %1833 = vmatprep.subr.bf16.mxu0 0
    %1834 = vmatpush1.bf16.msra.mxu0 0
    %1835 = vmatprep.subr.bf16.mxu0 0
    %1836 = vmatpush1.bf16.msra.mxu0 0
    %1837 = vmatprep.subr.bf16.mxu0 0
    %1838 = vmatpush1.bf16.msra.mxu0 0
    %1839 = vmatprep.subr.bf16.mxu0 0
    %1840 = vmatpush1.bf16.msra.mxu0 0
    %1841 = vmatprep.subr.bf16.mxu0 0
    %1842 = vmatpush1.bf16.msra.mxu0 0
    %1843 = vmatprep.mubr.bf16.mxu0 0
    %1844 = vmatmul.mubr.bf16.gmra.mrb[0].mxu0 %v1809
    %v1845 = vpop.f32.mrb[0].mxu0
    %v1846 = vadd.f32 %v1795, %v1845
    %v1847 = vpop.f32.mrb[0].mxu0
    %v1848 = vpop.f32.mrb[0].mxu0
    %v1849 = vpop.f32.mrb[0].mxu0
    %1850 = vdwg.mxu0
    %vm1851 = vcmask 254976
    %1852 = vst.msk [vmem:[#allocation2] sm:$0x3] %vm1851, %v1846
    // Predicated region
    $region14: #{branchnet_forward.1} parent=1 // pred_check
      _
    $region15: #{branchnet_forward.1} parent=1 // pred_check_branch
      %1854 = sbr.rel (0) target = $region17
    $region16: #{branchnet_forward.1} parent=1 // pred_region
      %s1856 = ssub.s32 32, 32
      %1857 = vsyncadd [#allocation3], %s1856
      %s1859 = sshll.u32 [#allocation2], 4
      %s1860 = int_to_ptr.vmem [resolvable:$true] %s1859
      %1862 = dma.vmem_to_hbm [thread:$0]  %s1860, 32, %s3, [#allocation3]
    $region17: #{branchnet_forward.1} parent=1 // pred_fallthru
      _
    // Predicated region
    $region18: #{branchnet_forward.1} parent=1 // pred_check
      _
    $region19: #{branchnet_forward.1} parent=1 // pred_check_branch
      %1864 = sbr.rel (0) target = $region21
    $region20: #{branchnet_forward.1} parent=1 // pred_region
      %1865 = dma.done [#allocation3], 32
    $region21: #{branchnet_forward.1} parent=1 // pred_fallthru
      _
    %1866 = vsyncpa [#allocation3], 1

</llo_original>
